<compile_context>
chip_gen: v5e
topology: v5e:2x2
jax: 0.10.0
libtpu: 0.0.40
codegen_flags: <defaults>
</compile_context>

<pallas_src>
import functools
import math

import jax
import jax.numpy as jnp
from jax import lax
from jax.experimental import pallas as pl
from jax.experimental.pallas import tpu as pltpu


# ---------------------------------------------------------------------------
# Generation-aware sizing
# ---------------------------------------------------------------------------
def _vmem_capacity_bytes():
    try:
        return int(pltpu.get_tpu_info().vmem_capacity_bytes)
    except Exception:
        return 64 * 1024 * 1024  # conservative (v7x per-TC VMEM)


_VMEM_CAP = _vmem_capacity_bytes()
# ~75% of physical VMEM, capped at 100 MiB: 96 MiB on 128-MiB v5e/v6e, 48 MiB on v7x.
_VMEM_LIMIT_BYTES = min(int(_VMEM_CAP * 0.75), 100 * 1024 * 1024)
_GEMM_MAX_ROW_TILE = 1024 if _VMEM_CAP >= (100 * 1024 * 1024) else 512


def _round_up(n, m):
    return ((n + m - 1) // m) * m


def _pad2d(a, rows, cols):
    r, c = a.shape
    if r == rows and c == cols:
        return a
    return jnp.pad(a, ((0, rows - r), (0, cols - c)))


def _row_tile(n, max_tile):
    """Row tile for the FC gemm: full if small, else a 256-aligned tile."""
    if n <= max_tile:
        return n
    for cand in range(max_tile, 255, -256):      # prefer multiples of 256
        if n % cand == 0:
            return cand
    return max_tile                              # ragged last block clipped by Pallas


def _pick_time_block(T, B, d_in, h, budget, cap=16):
    """Timesteps per recurrence grid step, sized against the VMEM budget.

    budget >= 2*(tt*B*d_in*2) x  +  2*(tt*B*h*2) seq_out  +  tt*B*h*4 gates scratch
              + (d_in*h + h*h)*2 + h*4 invariants + 3*B*h*4 (h carry + h_final x2)
    """
    invariant = (d_in * h + h * h) * 2 + h * 4 + 3 * B * h * 4
    per_tt = B * (2 * d_in * 2 + 2 * h * 2 + h * 4)
    avail = max(budget - invariant, per_tt)
    tt = int(max(1, min(cap, T, avail // per_tt)))
    if tt >= T:
        return T                                 # full sequence: block rows == T*B
    # keep the (tt*B)-row block sublane aligned (multiple of 8 rows)
    g = 8 // math.gcd(8, B)
    tt = max(g, (tt // g) * g)
    return min(tt, T)


# ---------------------------------------------------------------------------
# Pallas kernels
# ---------------------------------------------------------------------------
def _gemm_bias_kernel(x_ref, w_ref, b_ref, o_ref, *, apply_relu):
    """o = x @ W + b (optionally ReLU). Row-tiled, MXU-driven, lane-dense output."""
    y = jnp.dot(x_ref[...], w_ref[...], preferred_element_type=jnp.float32)
    y = y + b_ref[...]
    if apply_relu:
        y = jnp.maximum(y, 0.0)
    o_ref[...] = y.astype(o_ref.dtype)


def _rnn_layer_kernel(x_ref, w_ih_ref, w_hh_ref, b_ref, seq_out_ref, h_final_ref,
                      h_scratch, gates_scratch, *, tt, tb, seq_len, ragged):
    """One tanh-RNN layer over a block of tt timesteps (grid axis 0 = time blocks).

    x_ref:         (tt*tb, D)  bf16  time-major flattened input slab
    w_ih_ref:      (D, H)      bf16  (loop-invariant, single-buffered)
    w_hh_ref:      (H, H)      bf16  (loop-invariant, single-buffered)
    b_ref:         (1, H)      f32   combined b_ih + b_hh
    seq_out_ref:   (tt*tb, H)  bf16  hidden sequence for this block
    h_final_ref:   (tb, H)     f32   final hidden state (written at last time block)
    h_scratch:     (tb, H)     f32   hidden-state carry across time blocks
    gates_scratch: (tt*tb, H)  f32   fused x @ W_ih + bias for this block
    """
    t_blk = pl.program_id(0)

    # Fused input projection for the whole time block: one wide MXU matmul that is
    # NOT on the serial h-dependence path, and never round-trips through HBM.
    gates_scratch[...] = (
        jnp.dot(x_ref[...], w_ih_ref[...], preferred_element_type=jnp.float32)
        + b_ref[...])

    @pl.when(t_blk == 0)
    def _():
        h_scratch[...] = jnp.zeros_like(h_scratch)

    def step(i, h):
        row = i * tb
        # TODO(synk): hold W_hh in MXU weight registers across the unrolled loop
        # (pltpu.matmul_push_rhs / matmul_acc_lhs / matmul_pop) to drop the per-step
        # weight push from the serial critical path.
        pre = gates_scratch[pl.ds(row, tb), :] + jnp.dot(
            h.astype(w_hh_ref.dtype), w_hh_ref[...],
            preferred_element_type=jnp.float32)
        h_new = jnp.tanh(pre)                       # nn.RNN default nonlinearity
        if ragged:                                  # mask tail timesteps of last block
            h_new = jnp.where(t_blk * tt + i < seq_len, h_new, h)
        seq_out_ref[pl.ds(row, tb), :] = h_new.astype(seq_out_ref.dtype)
        return h_new

    h = lax.fori_loop(0, tt, step, h_scratch[...], unroll=True)
    h_scratch[...] = h

    @pl.when(t_blk == pl.num_programs(0) - 1)
    def _():
        h_final_ref[...] = h.astype(h_final_ref.dtype)


# ---------------------------------------------------------------------------
# Wrappers
# ---------------------------------------------------------------------------
def gemm_bias(x, w, b, *, apply_relu=False, out_dtype=jnp.float32):
    """Row-tiled (N, D) @ (D, O) + b, optional ReLU."""
    n, d = x.shape
    o = w.shape[1]
    tn = _row_tile(n, _GEMM_MAX_ROW_TILE)
    # TODO(synk): tile N (and K with an f32 accumulator) when d*o*2 bytes is large,
    # so the full weight slab never has to fit v7x's 64 MiB VMEM.
    grid_spec = pltpu.PrefetchScalarGridSpec(
        num_scalar_prefetch=0,
        grid=(pl.cdiv(n, tn),),
        in_specs=[
            pl.BlockSpec((tn, d), lambda i: (i, 0)),
            pl.BlockSpec((d, o), lambda i: (0, 0),
                         pipeline_mode=pl.Buffered(1)),   # invariant weight
            pl.BlockSpec((1, o), lambda i: (0, 0),
                         pipeline_mode=pl.Buffered(1)),   # invariant bias
        ],
        out_specs=pl.BlockSpec((tn, o), lambda i: (i, 0)),
    )
    return pl.pallas_call(
        functools.partial(_gemm_bias_kernel, apply_relu=apply_relu),
        out_shape=jax.ShapeDtypeStruct((n, o), out_dtype),
        grid_spec=grid_spec,
        compiler_params=pltpu.CompilerParams(
            dimension_semantics=("parallel",),
            vmem_limit_bytes=_VMEM_LIMIT_BYTES,
        ),
    )(x, w, b)


def rnn_layer(x_flat, w_ih, w_hh, bias, *, seq_len, batch, seq_dtype=jnp.bfloat16):
    """One tanh-RNN layer.

    x_flat: (T*B, D) bf16 time-major flattened input (row t*B + b)
    returns (seq_out (T*B, H) bf16, h_final (B, H) f32)
    """
    T, B = seq_len, batch
    d_in = x_flat.shape[1]
    H = w_hh.shape[1]

    tt = _pick_time_block(T, B, d_in, H, _VMEM_LIMIT_BYTES)
    grid_t = pl.cdiv(T, tt)
    ragged = (T % tt) != 0

    grid_spec = pltpu.PrefetchScalarGridSpec(
        num_scalar_prefetch=0,
        grid=(grid_t,),
        in_specs=[
            pl.BlockSpec((tt * B, d_in), lambda t: (t, 0)),            # input slab
            pl.BlockSpec((d_in, H), lambda t: (0, 0),
                         pipeline_mode=pl.Buffered(1)),                # W_ih invariant
            pl.BlockSpec((H, H), lambda t: (0, 0),
                         pipeline_mode=pl.Buffered(1)),                # W_hh invariant
            pl.BlockSpec((1, H), lambda t: (0, 0),
                         pipeline_mode=pl.Buffered(1)),                # bias invariant
        ],
        out_specs=[
            pl.BlockSpec((tt * B, H), lambda t: (t, 0)),               # hidden sequence
            pl.BlockSpec((B, H), lambda t: (0, 0)),                    # final hidden
        ],
        scratch_shapes=[
            pltpu.VMEM((B, H), jnp.float32),                           # h carry
            pltpu.VMEM((tt * B, H), jnp.float32),                      # fused gates
        ],
    )

    seq_out, h_final = pl.pallas_call(
        functools.partial(_rnn_layer_kernel, tt=tt, tb=B, seq_len=T, ragged=ragged),
        out_shape=(
            jax.ShapeDtypeStruct((T * B, H), seq_dtype),
            jax.ShapeDtypeStruct((B, H), jnp.float32),
        ),
        grid_spec=grid_spec,
        compiler_params=pltpu.CompilerParams(
            dimension_semantics=("arbitrary",),     # time is a true recurrence
            vmem_limit_bytes=_VMEM_LIMIT_BYTES,
        ),
    )(x_flat, w_ih, w_hh, bias)
    return seq_out, h_final


class RNNReLUPallas:
    """JAX/Pallas equivalent of the PyTorch RNN_ReLU module."""

    def __init__(self, input_size, output_size, hidden_dim, n_layers, key):
        self.input_size = input_size
        self.output_size = output_size
        self.hidden_dim = hidden_dim
        self.n_layers = n_layers

        H = hidden_dim
        Hp = _round_up(H, 128)            # lane-dense hidden width (zero padded)
        Op = _round_up(output_size, 128)  # lane-dense FC output width (zero padded)
        self._h_pad, self._o_pad = Hp, Op

        bound = 1.0 / (H ** 0.5)
        keys = jax.random.split(key, 4 * n_layers + 2)
        self.layers = []
        ki = 0
        for layer in range(n_layers):
            d_in = input_size if layer == 0 else H
            d_in_p = input_size if layer == 0 else Hp
            # Stored transposed relative to PyTorch ((in, H) so kernels do x @ W);
            # matmul operands bf16 for the MXU, biases f32; zero padding is exact.
            w_ih = jax.random.uniform(keys[ki], (d_in, H), jnp.float32,
                                      -bound, bound); ki += 1
            w_hh = jax.random.uniform(keys[ki], (H, H), jnp.float32,
                                      -bound, bound); ki += 1
            b_ih = jax.random.uniform(keys[ki], (H,), jnp.float32,
                                      -bound, bound); ki += 1
            b_hh = jax.random.uniform(keys[ki], (H,), jnp.float32,
                                      -bound, bound); ki += 1
            w_ih_p = _pad2d(w_ih.astype(jnp.bfloat16), d_in_p, Hp)
            w_hh_p = _pad2d(w_hh.astype(jnp.bfloat16), Hp, Hp)
            bias_p = _pad2d((b_ih + b_hh).reshape(1, H), 1, Hp)   # combined, f32
            self.layers.append((w_ih_p, w_hh_p, bias_p))

        fc_w = jax.random.uniform(keys[ki], (H, output_size), jnp.float32,
                                  -bound, bound); ki += 1
        fc_b = jax.random.uniform(keys[ki], (output_size,), jnp.float32,
                                  -bound, bound); ki += 1
        self.fc_w = _pad2d(fc_w.astype(jnp.bfloat16), Hp, Op)
        self.fc_b = _pad2d(fc_b.reshape(1, output_size), 1, Op)

    @functools.partial(jax.jit, static_argnums=0)
    def forward(self, x):
        """x: (B, T, input_size) batch-first, like the PyTorch module."""
        B, T, _ = x.shape
        H, O, Op = self.hidden_dim, self.output_size, self._o_pad

        # Time-major, flattened (T*B, D) so the fused projection is a plain 2-D
        # matmul; bf16 operands for the MXU.
        # TODO(synk): fold this transpose/cast into the layer-0 kernel's input DMA.
        cur = jnp.transpose(x, (1, 0, 2)).astype(jnp.bfloat16).reshape(T * B, -1)

        finals = []
        for (w_ih, w_hh, bias) in self.layers:
            cur, h_final = rnn_layer(cur, w_ih, w_hh, bias, seq_len=T, batch=B)
            finals.append(h_final[:, :H])                     # drop lane padding
        hidden = jnp.stack(finals, axis=0)                    # (n_layers, B, H) f32

        # FC + ReLU directly on the time-major flatten; only the narrow (T, B, Op)
        # result is transposed to batch-major, matching out.contiguous().view(-1, H).
        out_tb = gemm_bias(cur, self.fc_w, self.fc_b, apply_relu=True)   # (T*B, Op)
        out = jnp.transpose(out_tb.reshape(T, B, Op), (1, 0, 2)).reshape(B * T, Op)
        return out[:, :O], hidden


# ---------------------------------------------------------------------------
# Pure-JAX reference (mirrors the kernel's bf16 operand precision)
# ---------------------------------------------------------------------------
def _reference_forward(model, x):
    B, T, _ = x.shape
    H, O = model.hidden_dim, model.output_size
    f32 = jnp.float32
    cur = x.astype(jnp.bfloat16).astype(f32)                  # (B, T, D)
    finals = []
    for (w_ih, w_hh, bias) in model.layers:
        d_in = cur.shape[-1]
        wi = w_ih[:d_in, :H].astype(f32)
        wh = w_hh[:H, :H].astype(f32)
        b = bias[0, :H]
        h = jnp.zeros((B, H), f32)
        outs = []
        for t in range(T):
            xt = cur[:, t, :].astype(jnp.bfloat16).astype(f32)
            h16 = h.astype(jnp.bfloat16).astype(f32)
            h = jnp.tanh(xt @ wi + b + h16 @ wh)
            outs.append(h.astype(jnp.bfloat16).astype(f32))
        cur = jnp.stack(outs, axis=1)                         # (B, T, H)
        finals.append(h)
    hidden = jnp.stack(finals, axis=0)
    flat = cur.reshape(B * T, H).astype(jnp.bfloat16).astype(f32)
    out = jnp.maximum(flat @ model.fc_w[:H, :O].astype(f32) + model.fc_b[0, :O], 0.0)
    return out, hidden


if __name__ == "__main__":
    key = jax.random.PRNGKey(0)
    k_param, k_x = jax.random.split(key)

    batch, seq = 2, 8
    input_size, hidden_dim, output_size, n_layers = 16, 32, 10, 2

    model = RNNReLUPallas(input_size, output_size, hidden_dim, n_layers, k_param)
    x = jax.random.normal(k_x, (batch, seq, input_size), jnp.float32)

    out, hidden = model.forward(x)
    jax.block_until_ready((out, hidden))

    assert out.shape == (batch * seq, output_size)
    assert hidden.shape == (n_layers, batch, hidden_dim)
    assert bool(jnp.all(out >= 0.0))                          # ReLU applied

    out_ref, hidden_ref = _reference_forward(model, x)
    assert bool(jnp.allclose(out, out_ref, atol=2e-2, rtol=2e-2))
    assert bool(jnp.allclose(hidden, hidden_ref, atol=2e-2, rtol=2e-2))

    print("KERNEL_OK")
</pallas_src>

<mosaic_0001>
module attributes {stable_mosaic.version = 11 : i64} {
  func.func @_rnn_layer_kernel(%arg0: i32, %arg1: memref<16x16xbf16, #tpu.memory_space<vmem>>, %arg2: memref<16x128xbf16, #tpu.memory_space<vmem>>, %arg3: memref<128x128xbf16, #tpu.memory_space<vmem>>, %arg4: memref<1x128xf32, #tpu.memory_space<vmem>>, %arg5: memref<16x128xbf16, #tpu.memory_space<vmem>>, %arg6: memref<2x128xf32, #tpu.memory_space<vmem>>, %arg7: memref<2x128xf32, #tpu.memory_space<vmem>>, %arg8: memref<16x128xf32, #tpu.memory_space<vmem>>) attributes {dimension_semantics = [#tpu.dimension_semantics<arbitrary>], iteration_bounds = array<i64: 1>, scalar_prefetch = 0 : i64, scratch_operands = 2 : i64, tpu.core_type = #tpu.core_type<tc>, window_params = [{transform_indices = @transform_0, window_bounds = array<i64: 16, 16>}, {pipeline_mode = #tpu.pipeline_mode<synchronous>, transform_indices = @transform_1, window_bounds = array<i64: 16, 128>}, {pipeline_mode = #tpu.pipeline_mode<synchronous>, transform_indices = @transform_2, window_bounds = array<i64: 128, 128>}, {pipeline_mode = #tpu.pipeline_mode<synchronous>, transform_indices = @transform_3, window_bounds = array<i64: 1, 128>}, {transform_indices = @transform_4, window_bounds = array<i64: 16, 128>}, {pipeline_mode = #tpu.pipeline_mode<synchronous>, transform_indices = @transform_5, window_bounds = array<i64: 2, 128>}]} {
    %c0 = arith.constant 0 : index
    %c0_0 = arith.constant 0 : index
    %0 = vector.load %arg1[%c0, %c0_0] : memref<16x16xbf16, #tpu.memory_space<vmem>>, vector<16x16xbf16>
    %c0_1 = arith.constant 0 : index
    %c0_2 = arith.constant 0 : index
    %1 = vector.load %arg2[%c0_1, %c0_2] : memref<16x128xbf16, #tpu.memory_space<vmem>>, vector<16x128xbf16>
    %cst = arith.constant dense<0.000000e+00> : vector<16x128xf32>
    %2 = tpu.matmul %0, %1, %cst {dimension_numbers = #tpu.dot_dimension_numbers<[1], [0], [0], [1], [0, 0, 1, 1], [], []>} : vector<16x16xbf16>, vector<16x128xbf16>, vector<16x128xf32> -> vector<16x128xf32>
    %c0_3 = arith.constant 0 : index
    %c0_4 = arith.constant 0 : index
    %3 = vector.load %arg4[%c0_3, %c0_4] : memref<1x128xf32, #tpu.memory_space<vmem>>, vector<1x128xf32>
    %4 = vector.broadcast %3 : vector<1x128xf32> to vector<16x128xf32>
    %5 = arith.addf %2, %4 : vector<16x128xf32>
    %c0_5 = arith.constant 0 : index
    %c0_6 = arith.constant 0 : index
    %6 = vector.load %arg8[%c0_5, %c0_6] : memref<16x128xf32, #tpu.memory_space<vmem>>, vector<16x128xf32>
    tpu.vector_store %arg8[%c0_5, %c0_6], %5 {strides = array<i32>} : memref<16x128xf32, #tpu.memory_space<vmem>>, vector<16x128xf32>,
    %c0_i32 = arith.constant 0 : i32
    %7 = arith.cmpi eq, %arg0, %c0_i32 : i32
    %8 = arith.extui %7 : i1 to i32
    %c0_i32_7 = arith.constant 0 : i32
    %9 = arith.cmpi ne, %8, %c0_i32_7 : i32
    scf.if %9 {
      %cst_63 = arith.constant 0.000000e+00 : f32
      %103 = vector.broadcast %cst_63 : f32 to vector<2x128xf32>
      %c0_64 = arith.constant 0 : index
      %c0_65 = arith.constant 0 : index
      %104 = vector.load %arg7[%c0_64, %c0_65] : memref<2x128xf32, #tpu.memory_space<vmem>>, vector<2x128xf32>
      tpu.vector_store %arg7[%c0_64, %c0_65], %103 {strides = array<i32>} : memref<2x128xf32, #tpu.memory_space<vmem>>, vector<2x128xf32>,
    } else {
    }
    %c0_8 = arith.constant 0 : index
    %c0_9 = arith.constant 0 : index
    %10 = vector.load %arg7[%c0_8, %c0_9] : memref<2x128xf32, #tpu.memory_space<vmem>>, vector<2x128xf32>
    %c0_i32_10 = arith.constant 0 : i32
    %c2_i32 = arith.constant 2 : i32
    %11 = arith.muli %c0_i32_10, %c2_i32 : i32
    %12 = arith.index_cast %11 : i32 to index
    %c0_11 = arith.constant 0 : index
    %13 = vector.load %arg8[%12, %c0_11] : memref<16x128xf32, #tpu.memory_space<vmem>>, vector<2x128xf32>
    %14 = arith.truncf %10 : vector<2x128xf32> to vector<2x128xbf16>
    %c0_12 = arith.constant 0 : index
    %c0_13 = arith.constant 0 : index
    %15 = vector.load %arg3[%c0_12, %c0_13] : memref<128x128xbf16, #tpu.memory_space<vmem>>, vector<128x128xbf16>
    %cst_14 = arith.constant dense<0.000000e+00> : vector<2x128xf32>
    %16 = tpu.matmul %14, %15, %cst_14 {dimension_numbers = #tpu.dot_dimension_numbers<[1], [0], [0], [1], [0, 0, 1, 1], [], []>} : vector<2x128xbf16>, vector<128x128xbf16>, vector<2x128xf32> -> vector<2x128xf32>
    %17 = arith.addf %13, %16 : vector<2x128xf32>
    %18 = math.tanh %17 : vector<2x128xf32>
    %19 = arith.truncf %18 : vector<2x128xf32> to vector<2x128xbf16>
    %20 = arith.index_cast %11 : i32 to index
    %c0_15 = arith.constant 0 : index
    %21 = vector.load %arg5[%20, %c0_15] : memref<16x128xbf16, #tpu.memory_space<vmem>>, vector<2x128xbf16>
    tpu.vector_store %arg5[%20, %c0_15], %19 {strides = array<i32>} : memref<16x128xbf16, #tpu.memory_space<vmem>>, vector<2x128xbf16>,
    %c1_i32 = arith.constant 1 : i32
    %c2_i32_16 = arith.constant 2 : i32
    %22 = arith.muli %c1_i32, %c2_i32_16 : i32
    %23 = arith.index_cast %22 : i32 to index
    %c0_17 = arith.constant 0 : index
    %24 = vector.load %arg8[%23, %c0_17] : memref<16x128xf32, #tpu.memory_space<vmem>>, vector<2x128xf32>
    %25 = arith.truncf %18 : vector<2x128xf32> to vector<2x128xbf16>
    %c0_18 = arith.constant 0 : index
    %c0_19 = arith.constant 0 : index
    %26 = vector.load %arg3[%c0_18, %c0_19] : memref<128x128xbf16, #tpu.memory_space<vmem>>, vector<128x128xbf16>
    %cst_20 = arith.constant dense<0.000000e+00> : vector<2x128xf32>
    %27 = tpu.matmul %25, %26, %cst_20 {dimension_numbers = #tpu.dot_dimension_numbers<[1], [0], [0], [1], [0, 0, 1, 1], [], []>} : vector<2x128xbf16>, vector<128x128xbf16>, vector<2x128xf32> -> vector<2x128xf32>
    %28 = arith.addf %24, %27 : vector<2x128xf32>
    %29 = math.tanh %28 : vector<2x128xf32>
    %30 = arith.truncf %29 : vector<2x128xf32> to vector<2x128xbf16>
    %31 = arith.index_cast %22 : i32 to index
    %c0_21 = arith.constant 0 : index
    %32 = vector.load %arg5[%31, %c0_21] : memref<16x128xbf16, #tpu.memory_space<vmem>>, vector<2x128xbf16>
    tpu.vector_store %arg5[%31, %c0_21], %30 {strides = array<i32>} : memref<16x128xbf16, #tpu.memory_space<vmem>>, vector<2x128xbf16>,
    %c2_i32_22 = arith.constant 2 : i32
    %c2_i32_23 = arith.constant 2 : i32
    %33 = arith.muli %c2_i32_22, %c2_i32_23 : i32
    %34 = arith.index_cast %33 : i32 to index
    %c0_24 = arith.constant 0 : index
    %35 = vector.load %arg8[%34, %c0_24] : memref<16x128xf32, #tpu.memory_space<vmem>>, vector<2x128xf32>
    %36 = arith.truncf %29 : vector<2x128xf32> to vector<2x128xbf16>
    %c0_25 = arith.constant 0 : index
    %c0_26 = arith.constant 0 : index
    %37 = vector.load %arg3[%c0_25, %c0_26] : memref<128x128xbf16, #tpu.memory_space<vmem>>, vector<128x128xbf16>
    %cst_27 = arith.constant dense<0.000000e+00> : vector<2x128xf32>
    %38 = tpu.matmul %36, %37, %cst_27 {dimension_numbers = #tpu.dot_dimension_numbers<[1], [0], [0], [1], [0, 0, 1, 1], [], []>} : vector<2x128xbf16>, vector<128x128xbf16>, vector<2x128xf32> -> vector<2x128xf32>
    %39 = arith.addf %35, %38 : vector<2x128xf32>
    %40 = math.tanh %39 : vector<2x128xf32>
    %41 = arith.truncf %40 : vector<2x128xf32> to vector<2x128xbf16>
    %42 = arith.index_cast %33 : i32 to index
    %c0_28 = arith.constant 0 : index
    %43 = vector.load %arg5[%42, %c0_28] : memref<16x128xbf16, #tpu.memory_space<vmem>>, vector<2x128xbf16>
    tpu.vector_store %arg5[%42, %c0_28], %41 {strides = array<i32>} : memref<16x128xbf16, #tpu.memory_space<vmem>>, vector<2x128xbf16>,
    %c3_i32 = arith.constant 3 : i32
    %c2_i32_29 = arith.constant 2 : i32
    %44 = arith.muli %c3_i32, %c2_i32_29 : i32
    %45 = arith.index_cast %44 : i32 to index
    %c0_30 = arith.constant 0 : index
    %46 = vector.load %arg8[%45, %c0_30] : memref<16x128xf32, #tpu.memory_space<vmem>>, vector<2x128xf32>
    %47 = arith.truncf %40 : vector<2x128xf32> to vector<2x128xbf16>
    %c0_31 = arith.constant 0 : index
    %c0_32 = arith.constant 0 : index
    %48 = vector.load %arg3[%c0_31, %c0_32] : memref<128x128xbf16, #tpu.memory_space<vmem>>, vector<128x128xbf16>
    %cst_33 = arith.constant dense<0.000000e+00> : vector<2x128xf32>
    %49 = tpu.matmul %47, %48, %cst_33 {dimension_numbers = #tpu.dot_dimension_numbers<[1], [0], [0], [1], [0, 0, 1, 1], [], []>} : vector<2x128xbf16>, vector<128x128xbf16>, vector<2x128xf32> -> vector<2x128xf32>
    %50 = arith.addf %46, %49 : vector<2x128xf32>
    %51 = math.tanh %50 : vector<2x128xf32>
    %52 = arith.truncf %51 : vector<2x128xf32> to vector<2x128xbf16>
    %53 = arith.index_cast %44 : i32 to index
    %c0_34 = arith.constant 0 : index
    %54 = vector.load %arg5[%53, %c0_34] : memref<16x128xbf16, #tpu.memory_space<vmem>>, vector<2x128xbf16>
    tpu.vector_store %arg5[%53, %c0_34], %52 {strides = array<i32>} : memref<16x128xbf16, #tpu.memory_space<vmem>>, vector<2x128xbf16>,
    %c4_i32 = arith.constant 4 : i32
    %c2_i32_35 = arith.constant 2 : i32
    %55 = arith.muli %c4_i32, %c2_i32_35 : i32
    %56 = arith.index_cast %55 : i32 to index
    %c0_36 = arith.constant 0 : index
    %57 = vector.load %arg8[%56, %c0_36] : memref<16x128xf32, #tpu.memory_space<vmem>>, vector<2x128xf32>
    %58 = arith.truncf %51 : vector<2x128xf32> to vector<2x128xbf16>
    %c0_37 = arith.constant 0 : index
    %c0_38 = arith.constant 0 : index
    %59 = vector.load %arg3[%c0_37, %c0_38] : memref<128x128xbf16, #tpu.memory_space<vmem>>, vector<128x128xbf16>
    %cst_39 = arith.constant dense<0.000000e+00> : vector<2x128xf32>
    %60 = tpu.matmul %58, %59, %cst_39 {dimension_numbers = #tpu.dot_dimension_numbers<[1], [0], [0], [1], [0, 0, 1, 1], [], []>} : vector<2x128xbf16>, vector<128x128xbf16>, vector<2x128xf32> -> vector<2x128xf32>
    %61 = arith.addf %57, %60 : vector<2x128xf32>
    %62 = math.tanh %61 : vector<2x128xf32>
    %63 = arith.truncf %62 : vector<2x128xf32> to vector<2x128xbf16>
    %64 = arith.index_cast %55 : i32 to index
    %c0_40 = arith.constant 0 : index
    %65 = vector.load %arg5[%64, %c0_40] : memref<16x128xbf16, #tpu.memory_space<vmem>>, vector<2x128xbf16>
    tpu.vector_store %arg5[%64, %c0_40], %63 {strides = array<i32>} : memref<16x128xbf16, #tpu.memory_space<vmem>>, vector<2x128xbf16>,
    %c5_i32 = arith.constant 5 : i32
    %c2_i32_41 = arith.constant 2 : i32
    %66 = arith.muli %c5_i32, %c2_i32_41 : i32
    %67 = arith.index_cast %66 : i32 to index
    %c0_42 = arith.constant 0 : index
    %68 = vector.load %arg8[%67, %c0_42] : memref<16x128xf32, #tpu.memory_space<vmem>>, vector<2x128xf32>
    %69 = arith.truncf %62 : vector<2x128xf32> to vector<2x128xbf16>
    %c0_43 = arith.constant 0 : index
    %c0_44 = arith.constant 0 : index
    %70 = vector.load %arg3[%c0_43, %c0_44] : memref<128x128xbf16, #tpu.memory_space<vmem>>, vector<128x128xbf16>
    %cst_45 = arith.constant dense<0.000000e+00> : vector<2x128xf32>
    %71 = tpu.matmul %69, %70, %cst_45 {dimension_numbers = #tpu.dot_dimension_numbers<[1], [0], [0], [1], [0, 0, 1, 1], [], []>} : vector<2x128xbf16>, vector<128x128xbf16>, vector<2x128xf32> -> vector<2x128xf32>
    %72 = arith.addf %68, %71 : vector<2x128xf32>
    %73 = math.tanh %72 : vector<2x128xf32>
    %74 = arith.truncf %73 : vector<2x128xf32> to vector<2x128xbf16>
    %75 = arith.index_cast %66 : i32 to index
    %c0_46 = arith.constant 0 : index
    %76 = vector.load %arg5[%75, %c0_46] : memref<16x128xbf16, #tpu.memory_space<vmem>>, vector<2x128xbf16>
    tpu.vector_store %arg5[%75, %c0_46], %74 {strides = array<i32>} : memref<16x128xbf16, #tpu.memory_space<vmem>>, vector<2x128xbf16>,
    %c6_i32 = arith.constant 6 : i32
    %c2_i32_47 = arith.constant 2 : i32
    %77 = arith.muli %c6_i32, %c2_i32_47 : i32
    %78 = arith.index_cast %77 : i32 to index
    %c0_48 = arith.constant 0 : index
    %79 = vector.load %arg8[%78, %c0_48] : memref<16x128xf32, #tpu.memory_space<vmem>>, vector<2x128xf32>
    %80 = arith.truncf %73 : vector<2x128xf32> to vector<2x128xbf16>
    %c0_49 = arith.constant 0 : index
    %c0_50 = arith.constant 0 : index
    %81 = vector.load %arg3[%c0_49, %c0_50] : memref<128x128xbf16, #tpu.memory_space<vmem>>, vector<128x128xbf16>
    %cst_51 = arith.constant dense<0.000000e+00> : vector<2x128xf32>
    %82 = tpu.matmul %80, %81, %cst_51 {dimension_numbers = #tpu.dot_dimension_numbers<[1], [0], [0], [1], [0, 0, 1, 1], [], []>} : vector<2x128xbf16>, vector<128x128xbf16>, vector<2x128xf32> -> vector<2x128xf32>
    %83 = arith.addf %79, %82 : vector<2x128xf32>
    %84 = math.tanh %83 : vector<2x128xf32>
    %85 = arith.truncf %84 : vector<2x128xf32> to vector<2x128xbf16>
    %86 = arith.index_cast %77 : i32 to index
    %c0_52 = arith.constant 0 : index
    %87 = vector.load %arg5[%86, %c0_52] : memref<16x128xbf16, #tpu.memory_space<vmem>>, vector<2x128xbf16>
    tpu.vector_store %arg5[%86, %c0_52], %85 {strides = array<i32>} : memref<16x128xbf16, #tpu.memory_space<vmem>>, vector<2x128xbf16>,
    %c7_i32 = arith.constant 7 : i32
    %c2_i32_53 = arith.constant 2 : i32
    %88 = arith.muli %c7_i32, %c2_i32_53 : i32
    %89 = arith.index_cast %88 : i32 to index
    %c0_54 = arith.constant 0 : index
    %90 = vector.load %arg8[%89, %c0_54] : memref<16x128xf32, #tpu.memory_space<vmem>>, vector<2x128xf32>
    %91 = arith.truncf %84 : vector<2x128xf32> to vector<2x128xbf16>
    %c0_55 = arith.constant 0 : index
    %c0_56 = arith.constant 0 : index
    %92 = vector.load %arg3[%c0_55, %c0_56] : memref<128x128xbf16, #tpu.memory_space<vmem>>, vector<128x128xbf16>
    %cst_57 = arith.constant dense<0.000000e+00> : vector<2x128xf32>
    %93 = tpu.matmul %91, %92, %cst_57 {dimension_numbers = #tpu.dot_dimension_numbers<[1], [0], [0], [1], [0, 0, 1, 1], [], []>} : vector<2x128xbf16>, vector<128x128xbf16>, vector<2x128xf32> -> vector<2x128xf32>
    %94 = arith.addf %90, %93 : vector<2x128xf32>
    %95 = math.tanh %94 : vector<2x128xf32>
    %96 = arith.truncf %95 : vector<2x128xf32> to vector<2x128xbf16>
    %97 = arith.index_cast %88 : i32 to index
    %c0_58 = arith.constant 0 : index
    %98 = vector.load %arg5[%97, %c0_58] : memref<16x128xbf16, #tpu.memory_space<vmem>>, vector<2x128xbf16>
    tpu.vector_store %arg5[%97, %c0_58], %96 {strides = array<i32>} : memref<16x128xbf16, #tpu.memory_space<vmem>>, vector<2x128xbf16>,
    %c8_i32 = arith.constant 8 : i32
    %c0_59 = arith.constant 0 : index
    %c0_60 = arith.constant 0 : index
    %99 = vector.load %arg7[%c0_59, %c0_60] : memref<2x128xf32, #tpu.memory_space<vmem>>, vector<2x128xf32>
    tpu.vector_store %arg7[%c0_59, %c0_60], %95 {strides = array<i32>} : memref<2x128xf32, #tpu.memory_space<vmem>>, vector<2x128xf32>,
    %c0_i32_61 = arith.constant 0 : i32
    %100 = arith.cmpi eq, %arg0, %c0_i32_61 : i32
    %101 = arith.extui %100 : i1 to i32
    %c0_i32_62 = arith.constant 0 : i32
    %102 = arith.cmpi ne, %101, %c0_i32_62 : i32
    scf.if %102 {
      %c0_63 = arith.constant 0 : index
      %c0_64 = arith.constant 0 : index
      %103 = vector.load %arg6[%c0_63, %c0_64] : memref<2x128xf32, #tpu.memory_space<vmem>>, vector<2x128xf32>
      tpu.vector_store %arg6[%c0_63, %c0_64], %95 {strides = array<i32>} : memref<2x128xf32, #tpu.memory_space<vmem>>, vector<2x128xf32>,
    } else {
    }
    return
  }
  func.func @transform_0(%arg0: i32) -> (i32, i32) {
    %c0_i32 = arith.constant 0 : i32
    %c0_i32_0 = arith.constant 0 : i32
    return %arg0, %c0_i32 : i32, i32
  }
  func.func @transform_1(%arg0: i32) -> (i32, i32) {
    %c0_i32 = arith.constant 0 : i32
    %c0_i32_0 = arith.constant 0 : i32
    %c0_i32_1 = arith.constant 0 : i32
    return %c0_i32, %c0_i32_0 : i32, i32
  }
  func.func @transform_2(%arg0: i32) -> (i32, i32) {
    %c0_i32 = arith.constant 0 : i32
    %c0_i32_0 = arith.constant 0 : i32
    %c0_i32_1 = arith.constant 0 : i32
    return %c0_i32, %c0_i32_0 : i32, i32
  }
  func.func @transform_3(%arg0: i32) -> (i32, i32) {
    %c0_i32 = arith.constant 0 : i32
    %c0_i32_0 = arith.constant 0 : i32
    %c0_i32_1 = arith.constant 0 : i32
    return %c0_i32, %c0_i32_0 : i32, i32
  }
  func.func @transform_4(%arg0: i32) -> (i32, i32) {
    %c0_i32 = arith.constant 0 : i32
    %c0_i32_0 = arith.constant 0 : i32
    return %arg0, %c0_i32 : i32, i32
  }
  func.func @transform_5(%arg0: i32) -> (i32, i32) {
    %c0_i32 = arith.constant 0 : i32
    %c0_i32_0 = arith.constant 0 : i32
    %c0_i32_1 = arith.constant 0 : i32
    return %c0_i32, %c0_i32_0 : i32, i32
  }
}

module attributes {stable_mosaic.version = 11 : i64} {
  func.func @_gemm_bias_kernel(%arg0: i32, %arg1: memref<16x128xbf16, #tpu.memory_space<vmem>>, %arg2: memref<128x128xbf16, #tpu.memory_space<vmem>>, %arg3: memref<1x128xf32, #tpu.memory_space<vmem>>, %arg4: memref<16x128xf32, #tpu.memory_space<vmem>>) attributes {dimension_semantics = [#tpu.dimension_semantics<parallel>], iteration_bounds = array<i64: 1>, scalar_prefetch = 0 : i64, scratch_operands = 0 : i64, tpu.core_type = #tpu.core_type<tc>, window_params = [{transform_indices = @transform_0, window_bounds = array<i64: 16, 128>}, {pipeline_mode = #tpu.pipeline_mode<synchronous>, transform_indices = @transform_1, window_bounds = array<i64: 128, 128>}, {pipeline_mode = #tpu.pipeline_mode<synchronous>, transform_indices = @transform_2, window_bounds = array<i64: 1, 128>}, {transform_indices = @transform_3, window_bounds = array<i64: 16, 128>}]} {
    %c0 = arith.constant 0 : index
    %c0_0 = arith.constant 0 : index
    %0 = vector.load %arg1[%c0, %c0_0] : memref<16x128xbf16, #tpu.memory_space<vmem>>, vector<16x128xbf16>
    %c0_1 = arith.constant 0 : index
    %c0_2 = arith.constant 0 : index
    %1 = vector.load %arg2[%c0_1, %c0_2] : memref<128x128xbf16, #tpu.memory_space<vmem>>, vector<128x128xbf16>
    %cst = arith.constant dense<0.000000e+00> : vector<16x128xf32>
    %2 = tpu.matmul %0, %1, %cst {dimension_numbers = #tpu.dot_dimension_numbers<[1], [0], [0], [1], [0, 0, 1, 1], [], []>} : vector<16x128xbf16>, vector<128x128xbf16>, vector<16x128xf32> -> vector<16x128xf32>
    %c0_3 = arith.constant 0 : index
    %c0_4 = arith.constant 0 : index
    %3 = vector.load %arg3[%c0_3, %c0_4] : memref<1x128xf32, #tpu.memory_space<vmem>>, vector<1x128xf32>
    %4 = vector.broadcast %3 : vector<1x128xf32> to vector<16x128xf32>
    %5 = arith.addf %2, %4 : vector<16x128xf32>
    %cst_5 = arith.constant 0.000000e+00 : f32
    %6 = vector.broadcast %cst_5 : f32 to vector<16x128xf32>
    %7 = arith.maximumf %5, %6 : vector<16x128xf32>
    %c0_6 = arith.constant 0 : index
    %c0_7 = arith.constant 0 : index
    %8 = vector.load %arg4[%c0_6, %c0_7] : memref<16x128xf32, #tpu.memory_space<vmem>>, vector<16x128xf32>
    tpu.vector_store %arg4[%c0_6, %c0_7], %7 {strides = array<i32>} : memref<16x128xf32, #tpu.memory_space<vmem>>, vector<16x128xf32>,
    return
  }
  func.func @transform_0(%arg0: i32) -> (i32, i32) {
    %c0_i32 = arith.constant 0 : i32
    %c0_i32_0 = arith.constant 0 : i32
    return %arg0, %c0_i32 : i32, i32
  }
  func.func @transform_1(%arg0: i32) -> (i32, i32) {
    %c0_i32 = arith.constant 0 : i32
    %c0_i32_0 = arith.constant 0 : i32
    %c0_i32_1 = arith.constant 0 : i32
    return %c0_i32, %c0_i32_0 : i32, i32
  }
  func.func @transform_2(%arg0: i32) -> (i32, i32) {
    %c0_i32 = arith.constant 0 : i32
    %c0_i32_0 = arith.constant 0 : i32
    %c0_i32_1 = arith.constant 0 : i32
    return %c0_i32, %c0_i32_0 : i32, i32
  }
  func.func @transform_3(%arg0: i32) -> (i32, i32) {
    %c0_i32 = arith.constant 0 : i32
    %c0_i32_0 = arith.constant 0 : i32
    return %arg0, %c0_i32 : i32, i32
  }
}

module attributes {stable_mosaic.version = 11 : i64} {
  func.func @_rnn_layer_kernel(%arg0: i32, %arg1: memref<16x128xbf16, #tpu.memory_space<vmem>>, %arg2: memref<128x128xbf16, #tpu.memory_space<vmem>>, %arg3: memref<128x128xbf16, #tpu.memory_space<vmem>>, %arg4: memref<1x128xf32, #tpu.memory_space<vmem>>, %arg5: memref<16x128xbf16, #tpu.memory_space<vmem>>, %arg6: memref<2x128xf32, #tpu.memory_space<vmem>>, %arg7: memref<2x128xf32, #tpu.memory_space<vmem>>, %arg8: memref<16x128xf32, #tpu.memory_space<vmem>>) attributes {dimension_semantics = [#tpu.dimension_semantics<arbitrary>], iteration_bounds = array<i64: 1>, scalar_prefetch = 0 : i64, scratch_operands = 2 : i64, tpu.core_type = #tpu.core_type<tc>, window_params = [{transform_indices = @transform_0, window_bounds = array<i64: 16, 128>}, {pipeline_mode = #tpu.pipeline_mode<synchronous>, transform_indices = @transform_1, window_bounds = array<i64: 128, 128>}, {pipeline_mode = #tpu.pipeline_mode<synchronous>, transform_indices = @transform_2, window_bounds = array<i64: 128, 128>}, {pipeline_mode = #tpu.pipeline_mode<synchronous>, transform_indices = @transform_3, window_bounds = array<i64: 1, 128>}, {transform_indices = @transform_4, window_bounds = array<i64: 16, 128>}, {pipeline_mode = #tpu.pipeline_mode<synchronous>, transform_indices = @transform_5, window_bounds = array<i64: 2, 128>}]} {
    %c0 = arith.constant 0 : index
    %c0_0 = arith.constant 0 : index
    %0 = vector.load %arg1[%c0, %c0_0] : memref<16x128xbf16, #tpu.memory_space<vmem>>, vector<16x128xbf16>
    %c0_1 = arith.constant 0 : index
    %c0_2 = arith.constant 0 : index
    %1 = vector.load %arg2[%c0_1, %c0_2] : memref<128x128xbf16, #tpu.memory_space<vmem>>, vector<128x128xbf16>
    %cst = arith.constant dense<0.000000e+00> : vector<16x128xf32>
    %2 = tpu.matmul %0, %1, %cst {dimension_numbers = #tpu.dot_dimension_numbers<[1], [0], [0], [1], [0, 0, 1, 1], [], []>} : vector<16x128xbf16>, vector<128x128xbf16>, vector<16x128xf32> -> vector<16x128xf32>
    %c0_3 = arith.constant 0 : index
    %c0_4 = arith.constant 0 : index
    %3 = vector.load %arg4[%c0_3, %c0_4] : memref<1x128xf32, #tpu.memory_space<vmem>>, vector<1x128xf32>
    %4 = vector.broadcast %3 : vector<1x128xf32> to vector<16x128xf32>
    %5 = arith.addf %2, %4 : vector<16x128xf32>
    %c0_5 = arith.constant 0 : index
    %c0_6 = arith.constant 0 : index
    %6 = vector.load %arg8[%c0_5, %c0_6] : memref<16x128xf32, #tpu.memory_space<vmem>>, vector<16x128xf32>
    tpu.vector_store %arg8[%c0_5, %c0_6], %5 {strides = array<i32>} : memref<16x128xf32, #tpu.memory_space<vmem>>, vector<16x128xf32>,
    %c0_i32 = arith.constant 0 : i32
    %7 = arith.cmpi eq, %arg0, %c0_i32 : i32
    %8 = arith.extui %7 : i1 to i32
    %c0_i32_7 = arith.constant 0 : i32
    %9 = arith.cmpi ne, %8, %c0_i32_7 : i32
    scf.if %9 {
      %cst_63 = arith.constant 0.000000e+00 : f32
      %103 = vector.broadcast %cst_63 : f32 to vector<2x128xf32>
      %c0_64 = arith.constant 0 : index
      %c0_65 = arith.constant 0 : index
      %104 = vector.load %arg7[%c0_64, %c0_65] : memref<2x128xf32, #tpu.memory_space<vmem>>, vector<2x128xf32>
      tpu.vector_store %arg7[%c0_64, %c0_65], %103 {strides = array<i32>} : memref<2x128xf32, #tpu.memory_space<vmem>>, vector<2x128xf32>,
    } else {
    }
    %c0_8 = arith.constant 0 : index
    %c0_9 = arith.constant 0 : index
    %10 = vector.load %arg7[%c0_8, %c0_9] : memref<2x128xf32, #tpu.memory_space<vmem>>, vector<2x128xf32>
    %c0_i32_10 = arith.constant 0 : i32
    %c2_i32 = arith.constant 2 : i32
    %11 = arith.muli %c0_i32_10, %c2_i32 : i32
    %12 = arith.index_cast %11 : i32 to index
    %c0_11 = arith.constant 0 : index
    %13 = vector.load %arg8[%12, %c0_11] : memref<16x128xf32, #tpu.memory_space<vmem>>, vector<2x128xf32>
    %14 = arith.truncf %10 : vector<2x128xf32> to vector<2x128xbf16>
    %c0_12 = arith.constant 0 : index
    %c0_13 = arith.constant 0 : index
    %15 = vector.load %arg3[%c0_12, %c0_13] : memref<128x128xbf16, #tpu.memory_space<vmem>>, vector<128x128xbf16>
    %cst_14 = arith.constant dense<0.000000e+00> : vector<2x128xf32>
    %16 = tpu.matmul %14, %15, %cst_14 {dimension_numbers = #tpu.dot_dimension_numbers<[1], [0], [0], [1], [0, 0, 1, 1], [], []>} : vector<2x128xbf16>, vector<128x128xbf16>, vector<2x128xf32> -> vector<2x128xf32>
    %17 = arith.addf %13, %16 : vector<2x128xf32>
    %18 = math.tanh %17 : vector<2x128xf32>
    %19 = arith.truncf %18 : vector<2x128xf32> to vector<2x128xbf16>
    %20 = arith.index_cast %11 : i32 to index
    %c0_15 = arith.constant 0 : index
    %21 = vector.load %arg5[%20, %c0_15] : memref<16x128xbf16, #tpu.memory_space<vmem>>, vector<2x128xbf16>
    tpu.vector_store %arg5[%20, %c0_15], %19 {strides = array<i32>} : memref<16x128xbf16, #tpu.memory_space<vmem>>, vector<2x128xbf16>,
    %c1_i32 = arith.constant 1 : i32
    %c2_i32_16 = arith.constant 2 : i32
    %22 = arith.muli %c1_i32, %c2_i32_16 : i32
    %23 = arith.index_cast %22 : i32 to index
    %c0_17 = arith.constant 0 : index
    %24 = vector.load %arg8[%23, %c0_17] : memref<16x128xf32, #tpu.memory_space<vmem>>, vector<2x128xf32>
    %25 = arith.truncf %18 : vector<2x128xf32> to vector<2x128xbf16>
    %c0_18 = arith.constant 0 : index
    %c0_19 = arith.constant 0 : index
    %26 = vector.load %arg3[%c0_18, %c0_19] : memref<128x128xbf16, #tpu.memory_space<vmem>>, vector<128x128xbf16>
    %cst_20 = arith.constant dense<0.000000e+00> : vector<2x128xf32>
    %27 = tpu.matmul %25, %26, %cst_20 {dimension_numbers = #tpu.dot_dimension_numbers<[1], [0], [0], [1], [0, 0, 1, 1], [], []>} : vector<2x128xbf16>, vector<128x128xbf16>, vector<2x128xf32> -> vector<2x128xf32>
    %28 = arith.addf %24, %27 : vector<2x128xf32>
    %29 = math.tanh %28 : vector<2x128xf32>
    %30 = arith.truncf %29 : vector<2x128xf32> to vector<2x128xbf16>
    %31 = arith.index_cast %22 : i32 to index
    %c0_21 = arith.constant 0 : index
    %32 = vector.load %arg5[%31, %c0_21] : memref<16x128xbf16, #tpu.memory_space<vmem>>, vector<2x128xbf16>
    tpu.vector_store %arg5[%31, %c0_21], %30 {strides = array<i32>} : memref<16x128xbf16, #tpu.memory_space<vmem>>, vector<2x128xbf16>,
    %c2_i32_22 = arith.constant 2 : i32
    %c2_i32_23 = arith.constant 2 : i32
    %33 = arith.muli %c2_i32_22, %c2_i32_23 : i32
    %34 = arith.index_cast %33 : i32 to index
    %c0_24 = arith.constant 0 : index
    %35 = vector.load %arg8[%34, %c0_24] : memref<16x128xf32, #tpu.memory_space<vmem>>, vector<2x128xf32>
    %36 = arith.truncf %29 : vector<2x128xf32> to vector<2x128xbf16>
    %c0_25 = arith.constant 0 : index
    %c0_26 = arith.constant 0 : index
    %37 = vector.load %arg3[%c0_25, %c0_26] : memref<128x128xbf16, #tpu.memory_space<vmem>>, vector<128x128xbf16>
    %cst_27 = arith.constant dense<0.000000e+00> : vector<2x128xf32>
    %38 = tpu.matmul %36, %37, %cst_27 {dimension_numbers = #tpu.dot_dimension_numbers<[1], [0], [0], [1], [0, 0, 1, 1], [], []>} : vector<2x128xbf16>, vector<128x128xbf16>, vector<2x128xf32> -> vector<2x128xf32>
    %39 = arith.addf %35, %38 : vector<2x128xf32>
    %40 = math.tanh %39 : vector<2x128xf32>
    %41 = arith.truncf %40 : vector<2x128xf32> to vector<2x128xbf16>
    %42 = arith.index_cast %33 : i32 to index
    %c0_28 = arith.constant 0 : index
    %43 = vector.load %arg5[%42, %c0_28] : memref<16x128xbf16, #tpu.memory_space<vmem>>, vector<2x128xbf16>
    tpu.vector_store %arg5[%42, %c0_28], %41 {strides = array<i32>} : memref<16x128xbf16, #tpu.memory_space<vmem>>, vector<2x128xbf16>,
    %c3_i32 = arith.constant 3 : i32
    %c2_i32_29 = arith.constant 2 : i32
    %44 = arith.muli %c3_i32, %c2_i32_29 : i32
    %45 = arith.index_cast %44 : i32 to index
    %c0_30 = arith.constant 0 : index
    %46 = vector.load %arg8[%45, %c0_30] : memref<16x128xf32, #tpu.memory_space<vmem>>, vector<2x128xf32>
    %47 = arith.truncf %40 : vector<2x128xf32> to vector<2x128xbf16>
    %c0_31 = arith.constant 0 : index
    %c0_32 = arith.constant 0 : index
    %48 = vector.load %arg3[%c0_31, %c0_32] : memref<128x128xbf16, #tpu.memory_space<vmem>>, vector<128x128xbf16>
    %cst_33 = arith.constant dense<0.000000e+00> : vector<2x128xf32>
    %49 = tpu.matmul %47, %48, %cst_33 {dimension_numbers = #tpu.dot_dimension_numbers<[1], [0], [0], [1], [0, 0, 1, 1], [], []>} : vector<2x128xbf16>, vector<128x128xbf16>, vector<2x128xf32> -> vector<2x128xf32>
    %50 = arith.addf %46, %49 : vector<2x128xf32>
    %51 = math.tanh %50 : vector<2x128xf32>
    %52 = arith.truncf %51 : vector<2x128xf32> to vector<2x128xbf16>
    %53 = arith.index_cast %44 : i32 to index
    %c0_34 = arith.constant 0 : index
    %54 = vector.load %arg5[%53, %c0_34] : memref<16x128xbf16, #tpu.memory_space<vmem>>, vector<2x128xbf16>
    tpu.vector_store %arg5[%53, %c0_34], %52 {strides = array<i32>} : memref<16x128xbf16, #tpu.memory_space<vmem>>, vector<2x128xbf16>,
    %c4_i32 = arith.constant 4 : i32
    %c2_i32_35 = arith.constant 2 : i32
    %55 = arith.muli %c4_i32, %c2_i32_35 : i32
    %56 = arith.index_cast %55 : i32 to index
    %c0_36 = arith.constant 0 : index
    %57 = vector.load %arg8[%56, %c0_36] : memref<16x128xf32, #tpu.memory_space<vmem>>, vector<2x128xf32>
    %58 = arith.truncf %51 : vector<2x128xf32> to vector<2x128xbf16>
    %c0_37 = arith.constant 0 : index
    %c0_38 = arith.constant 0 : index
    %59 = vector.load %arg3[%c0_37, %c0_38] : memref<128x128xbf16, #tpu.memory_space<vmem>>, vector<128x128xbf16>
    %cst_39 = arith.constant dense<0.000000e+00> : vector<2x128xf32>
    %60 = tpu.matmul %58, %59, %cst_39 {dimension_numbers = #tpu.dot_dimension_numbers<[1], [0], [0], [1], [0, 0, 1, 1], [], []>} : vector<2x128xbf16>, vector<128x128xbf16>, vector<2x128xf32> -> vector<2x128xf32>
    %61 = arith.addf %57, %60 : vector<2x128xf32>
    %62 = math.tanh %61 : vector<2x128xf32>
    %63 = arith.truncf %62 : vector<2x128xf32> to vector<2x128xbf16>
    %64 = arith.index_cast %55 : i32 to index
    %c0_40 = arith.constant 0 : index
    %65 = vector.load %arg5[%64, %c0_40] : memref<16x128xbf16, #tpu.memory_space<vmem>>, vector<2x128xbf16>
    tpu.vector_store %arg5[%64, %c0_40], %63 {strides = array<i32>} : memref<16x128xbf16, #tpu.memory_space<vmem>>, vector<2x128xbf16>,
    %c5_i32 = arith.constant 5 : i32
    %c2_i32_41 = arith.constant 2 : i32
    %66 = arith.muli %c5_i32, %c2_i32_41 : i32
    %67 = arith.index_cast %66 : i32 to index
    %c0_42 = arith.constant 0 : index
    %68 = vector.load %arg8[%67, %c0_42] : memref<16x128xf32, #tpu.memory_space<vmem>>, vector<2x128xf32>
    %69 = arith.truncf %62 : vector<2x128xf32> to vector<2x128xbf16>
    %c0_43 = arith.constant 0 : index
    %c0_44 = arith.constant 0 : index
    %70 = vector.load %arg3[%c0_43, %c0_44] : memref<128x128xbf16, #tpu.memory_space<vmem>>, vector<128x128xbf16>
    %cst_45 = arith.constant dense<0.000000e+00> : vector<2x128xf32>
    %71 = tpu.matmul %69, %70, %cst_45 {dimension_numbers = #tpu.dot_dimension_numbers<[1], [0], [0], [1], [0, 0, 1, 1], [], []>} : vector<2x128xbf16>, vector<128x128xbf16>, vector<2x128xf32> -> vector<2x128xf32>
    %72 = arith.addf %68, %71 : vector<2x128xf32>
    %73 = math.tanh %72 : vector<2x128xf32>
    %74 = arith.truncf %73 : vector<2x128xf32> to vector<2x128xbf16>
    %75 = arith.index_cast %66 : i32 to index
    %c0_46 = arith.constant 0 : index
    %76 = vector.load %arg5[%75, %c0_46] : memref<16x128xbf16, #tpu.memory_space<vmem>>, vector<2x128xbf16>
    tpu.vector_store %arg5[%75, %c0_46], %74 {strides = array<i32>} : memref<16x128xbf16, #tpu.memory_space<vmem>>, vector<2x128xbf16>,
    %c6_i32 = arith.constant 6 : i32
    %c2_i32_47 = arith.constant 2 : i32
    %77 = arith.muli %c6_i32, %c2_i32_47 : i32
    %78 = arith.index_cast %77 : i32 to index
    %c0_48 = arith.constant 0 : index
    %79 = vector.load %arg8[%78, %c0_48] : memref<16x128xf32, #tpu.memory_space<vmem>>, vector<2x128xf32>
    %80 = arith.truncf %73 : vector<2x128xf32> to vector<2x128xbf16>
    %c0_49 = arith.constant 0 : index
    %c0_50 = arith.constant 0 : index
    %81 = vector.load %arg3[%c0_49, %c0_50] : memref<128x128xbf16, #tpu.memory_space<vmem>>, vector<128x128xbf16>
    %cst_51 = arith.constant dense<0.000000e+00> : vector<2x128xf32>
    %82 = tpu.matmul %80, %81, %cst_51 {dimension_numbers = #tpu.dot_dimension_numbers<[1], [0], [0], [1], [0, 0, 1, 1], [], []>} : vector<2x128xbf16>, vector<128x128xbf16>, vector<2x128xf32> -> vector<2x128xf32>
    %83 = arith.addf %79, %82 : vector<2x128xf32>
    %84 = math.tanh %83 : vector<2x128xf32>
    %85 = arith.truncf %84 : vector<2x128xf32> to vector<2x128xbf16>
    %86 = arith.index_cast %77 : i32 to index
    %c0_52 = arith.constant 0 : index
    %87 = vector.load %arg5[%86, %c0_52] : memref<16x128xbf16, #tpu.memory_space<vmem>>, vector<2x128xbf16>
    tpu.vector_store %arg5[%86, %c0_52], %85 {strides = array<i32>} : memref<16x128xbf16, #tpu.memory_space<vmem>>, vector<2x128xbf16>,
    %c7_i32 = arith.constant 7 : i32
    %c2_i32_53 = arith.constant 2 : i32
    %88 = arith.muli %c7_i32, %c2_i32_53 : i32
    %89 = arith.index_cast %88 : i32 to index
    %c0_54 = arith.constant 0 : index
    %90 = vector.load %arg8[%89, %c0_54] : memref<16x128xf32, #tpu.memory_space<vmem>>, vector<2x128xf32>
    %91 = arith.truncf %84 : vector<2x128xf32> to vector<2x128xbf16>
    %c0_55 = arith.constant 0 : index
    %c0_56 = arith.constant 0 : index
    %92 = vector.load %arg3[%c0_55, %c0_56] : memref<128x128xbf16, #tpu.memory_space<vmem>>, vector<128x128xbf16>
    %cst_57 = arith.constant dense<0.000000e+00> : vector<2x128xf32>
    %93 = tpu.matmul %91, %92, %cst_57 {dimension_numbers = #tpu.dot_dimension_numbers<[1], [0], [0], [1], [0, 0, 1, 1], [], []>} : vector<2x128xbf16>, vector<128x128xbf16>, vector<2x128xf32> -> vector<2x128xf32>
    %94 = arith.addf %90, %93 : vector<2x128xf32>
    %95 = math.tanh %94 : vector<2x128xf32>
    %96 = arith.truncf %95 : vector<2x128xf32> to vector<2x128xbf16>
    %97 = arith.index_cast %88 : i32 to index
    %c0_58 = arith.constant 0 : index
    %98 = vector.load %arg5[%97, %c0_58] : memref<16x128xbf16, #tpu.memory_space<vmem>>, vector<2x128xbf16>
    tpu.vector_store %arg5[%97, %c0_58], %96 {strides = array<i32>} : memref<16x128xbf16, #tpu.memory_space<vmem>>, vector<2x128xbf16>,
    %c8_i32 = arith.constant 8 : i32
    %c0_59 = arith.constant 0 : index
    %c0_60 = arith.constant 0 : index
    %99 = vector.load %arg7[%c0_59, %c0_60] : memref<2x128xf32, #tpu.memory_space<vmem>>, vector<2x128xf32>
    tpu.vector_store %arg7[%c0_59, %c0_60], %95 {strides = array<i32>} : memref<2x128xf32, #tpu.memory_space<vmem>>, vector<2x128xf32>,
    %c0_i32_61 = arith.constant 0 : i32
    %100 = arith.cmpi eq, %arg0, %c0_i32_61 : i32
    %101 = arith.extui %100 : i1 to i32
    %c0_i32_62 = arith.constant 0 : i32
    %102 = arith.cmpi ne, %101, %c0_i32_62 : i32
    scf.if %102 {
      %c0_63 = arith.constant 0 : index
      %c0_64 = arith.constant 0 : index
      %103 = vector.load %arg6[%c0_63, %c0_64] : memref<2x128xf32, #tpu.memory_space<vmem>>, vector<2x128xf32>
      tpu.vector_store %arg6[%c0_63, %c0_64], %95 {strides = array<i32>} : memref<2x128xf32, #tpu.memory_space<vmem>>, vector<2x128xf32>,
    } else {
    }
    return
  }
  func.func @transform_0(%arg0: i32) -> (i32, i32) {
    %c0_i32 = arith.constant 0 : i32
    %c0_i32_0 = arith.constant 0 : i32
    return %arg0, %c0_i32 : i32, i32
  }
  func.func @transform_1(%arg0: i32) -> (i32, i32) {
    %c0_i32 = arith.constant 0 : i32
    %c0_i32_0 = arith.constant 0 : i32
    %c0_i32_1 = arith.constant 0 : i32
    return %c0_i32, %c0_i32_0 : i32, i32
  }
  func.func @transform_2(%arg0: i32) -> (i32, i32) {
    %c0_i32 = arith.constant 0 : i32
    %c0_i32_0 = arith.constant 0 : i32
    %c0_i32_1 = arith.constant 0 : i32
    return %c0_i32, %c0_i32_0 : i32, i32
  }
  func.func @transform_3(%arg0: i32) -> (i32, i32) {
    %c0_i32 = arith.constant 0 : i32
    %c0_i32_0 = arith.constant 0 : i32
    %c0_i32_1 = arith.constant 0 : i32
    return %c0_i32, %c0_i32_0 : i32, i32
  }
  func.func @transform_4(%arg0: i32) -> (i32, i32) {
    %c0_i32 = arith.constant 0 : i32
    %c0_i32_0 = arith.constant 0 : i32
    return %arg0, %c0_i32 : i32, i32
  }
  func.func @transform_5(%arg0: i32) -> (i32, i32) {
    %c0_i32 = arith.constant 0 : i32
    %c0_i32_0 = arith.constant 0 : i32
    %c0_i32_1 = arith.constant 0 : i32
    return %c0_i32, %c0_i32_0 : i32, i32
  }
}

</mosaic_0001>

<llo_original>
// kernel: forward.5
$region0: #{forward.5}
  #allocation0 [shape = 'u32[]', space=smem, size = 0x4, offset = 0x4, fixed_abs, tag = 'smem constant byte address 0x4 - core index']
  #allocation1 [shape = 'u32[72,128]{1,0:T(1,128)}', space=vmem, size = 0x9000, scoped, tag = 'internal scratch']
  %s0 = inlined_call_operand.vmem [shape: bf16[16,128], index: 0, kind: input, shape index: {}]
  %s1 = inlined_call_operand.hbm [shape: bf16[128,128], index: 1, kind: input, shape index: {}]
  %s2 = inlined_call_operand.vmem [shape: f32[1,128], index: 2, kind: input, shape index: {}]
  %s3 = inlined_call_operand.vmem [shape: f32[16,128], index: 3, kind: output, shape index: {}]
  %s4 = sld [smem:[#allocation0]]
  $region26: #{forward.5} parent=0
    _
  %s6 = ssub.s32 1, %s4
  %s7 = scalar_select 0, %s6, %s4
  $region1: #{forward.5} parent=0
    #allocation2 [shape = 'u8[32768]{0}', space=vmem, size = 0x8000, scoped, tag = 'input window, operand 1, single buffered']
    #allocation3 [shape = 's32[1]{0}', space=sflag, size = 0x4, scoped, tag = 'scoped memory for forward.5']
    %8 = vsyncpa [#allocation3], 0
    // Predicated region
    $region2: #{forward.5} parent=1 // pred_check
      _
    $region3: #{forward.5} parent=1 // pred_check_branch
      %10 = sbr.rel (0) target = $region5
    $region4: #{forward.5} parent=1 // pred_region
      _
    $region5: #{forward.5} parent=1 // pred_fallthru
      _
    // Predicated region
    $region6: #{forward.5} parent=1 // pred_check
      _
    $region7: #{forward.5} parent=1 // pred_check_branch
      %12 = sbr.rel (0) target = $region9
    $region8: #{forward.5} parent=1 // pred_region
      %14 = vsyncadd [#allocation3], 0
      %s15 = sshll.u32 %s1, 4
      %s16 = int_to_ptr.hbm [resolvable:$true] %s15
      %s17 = sshll.u32 [#allocation2], 4
      %s18 = int_to_ptr.vmem [resolvable:$true] %s17
      %23 = dma.hbm_to_vmem [thread:$0]  %s16, 1024, %s18, [#allocation3], 64, 64, 4
    $region9: #{forward.5} parent=1 // pred_fallthru
      _
    // Predicated region
    $region10: #{forward.5} parent=1 // pred_check
      _
    $region11: #{forward.5} parent=1 // pred_check_branch
      %25 = sbr.rel (0) target = $region13
    $region12: #{forward.5} parent=1 // pred_region
      _
    $region13: #{forward.5} parent=1 // pred_fallthru
      _
    // Predicated region
    $region14: #{forward.5} parent=1 // pred_check
      _
    $region15: #{forward.5} parent=1 // pred_check_branch
      %27 = sbr.rel (0) target = $region17
    $region16: #{forward.5} parent=1 // pred_region
      %29 = dma.done [#allocation3], 1024
    $region17: #{forward.5} parent=1 // pred_fallthru
      _
    %v30 = vld [vmem:[%s0] sm:$0xf]
    %v31 = vld [vmem:[%s0 + $0x4] sm:$0xf]
    %v32 = vld [vmem:[#allocation2] sm:$0xf]
    %v33 = vld [vmem:[#allocation2 + $0x4] sm:$0xf]
    %v34 = vld [vmem:[#allocation2 + $0x8] sm:$0xf]
    %v35 = vld [vmem:[#allocation2 + $0xc] sm:$0xf]
    %v36 = vld [vmem:[#allocation2 + $0x10] sm:$0xf]
    %v37 = vld [vmem:[#allocation2 + $0x14] sm:$0xf]
    %v38 = vld [vmem:[#allocation2 + $0x18] sm:$0xf]
    %v39 = vld [vmem:[#allocation2 + $0x1c] sm:$0xf]
    %v40 = vld [vmem:[#allocation2 + $0x20] sm:$0xf]
    %v41 = vld [vmem:[#allocation2 + $0x24] sm:$0xf]
    %v42 = vld [vmem:[#allocation2 + $0x28] sm:$0xf]
    %v43 = vld [vmem:[#allocation2 + $0x2c] sm:$0xf]
    %v44 = vld [vmem:[#allocation2 + $0x30] sm:$0xf]
    %v45 = vld [vmem:[#allocation2 + $0x34] sm:$0xf]
    %v46 = vld [vmem:[#allocation2 + $0x38] sm:$0xf]
    %v47 = vld [vmem:[#allocation2 + $0x3c] sm:$0xf]
    %v48 = vld [vmem:[%s2] sm:$0x1]
    %v50 = vperm.slane %v48, 0
    %v54 = vunpack.c.l.b16 %v30
    %v55 = vunpack.c.l.b16 %v31
    %v56 = vpack.c.b16 %v55, %v54
    %v74 = vunpack.c.l.b16 %v32
    %v75 = vunpack.c.l.b16 %v33
    %v76 = vunpack.c.l.b16 %v34
    %v77 = vunpack.c.l.b16 %v35
    %v78 = vunpack.c.l.b16 %v36
    %v79 = vunpack.c.l.b16 %v37
    %v80 = vunpack.c.l.b16 %v38
    %v81 = vunpack.c.l.b16 %v39
    %v82 = vunpack.c.l.b16 %v40
    %v83 = vunpack.c.l.b16 %v41
    %v84 = vunpack.c.l.b16 %v42
    %v85 = vunpack.c.l.b16 %v43
    %v86 = vunpack.c.l.b16 %v44
    %v87 = vunpack.c.l.b16 %v45
    %v88 = vunpack.c.l.b16 %v46
    %v89 = vunpack.c.l.b16 %v47
    %v90 = vpack.c.b16 %v75, %v74
    %v91 = vpack.c.b16 %v77, %v76
    %v92 = vpack.c.b16 %v79, %v78
    %v93 = vpack.c.b16 %v81, %v80
    %v94 = vpack.c.b16 %v83, %v82
    %v95 = vpack.c.b16 %v85, %v84
    %v96 = vpack.c.b16 %v87, %v86
    %v97 = vpack.c.b16 %v89, %v88
    %106 = vmatpush.bf16.msra.mxu0 %v97
    %107 = vmatpush.bf16.msra.mxu0 %v96
    %108 = vmatpush.bf16.msra.mxu0 %v95
    %109 = vmatpush.bf16.msra.mxu0 %v94
    %110 = vmatpush.bf16.msra.mxu0 %v93
    %111 = vmatpush.bf16.msra.mxu0 %v92
    %112 = vmatpush.bf16.msra.mxu0 %v91
    %113 = vmatpush.bf16.msra.mxu0 %v90
    %114 = vmatmul.bf16.gmra.mxu0 %v56
    %v115 = vpop.f32.mrf.mxu0
    %v116 = vadd.f32 %v50, %v115
    %v117 = vpop.f32.mrf.mxu0
    %v118 = vadd.f32 %v50, %v117
    %119 = vdwg.mxu0
    %v120 = vmax.f32 %v116, 0.0
    %v121 = vmax.f32 %v118, 0.0
    %122 = vst [vmem:[%s3] sm:$0xff] %v120
    %123 = vst [vmem:[%s3 + $0x8] sm:$0xff] %v121
    // Predicated region
    $region18: #{forward.5} parent=1 // pred_check
      _
    $region19: #{forward.5} parent=1 // pred_check_branch
      %125 = sbr.rel (0) target = $region21
    $region20: #{forward.5} parent=1 // pred_region
      _
    $region21: #{forward.5} parent=1 // pred_fallthru
      _
    // Predicated region
    $region22: #{forward.5} parent=1 // pred_check
      _
    $region23: #{forward.5} parent=1 // pred_check_branch
      %127 = sbr.rel (0) target = $region25
    $region24: #{forward.5} parent=1 // pred_region
      _
    $region25: #{forward.5} parent=1 // pred_fallthru
      _
    %128 = vsyncpa [#allocation3], 1

// kernel: forward.3
$region0: #{forward.3}
  #allocation0 [shape = 'u32[]', space=smem, size = 0x4, offset = 0x4, fixed_abs, tag = 'smem constant byte address 0x4 - core index']
  #allocation1 [shape = 'u32[72,128]{1,0:T(1,128)}', space=vmem, size = 0x9000, scoped, tag = 'internal scratch']
  #allocation2 [shape = 'f32[2,128]{1,0:T(2,128)}', space=vmem, size = 0x400, scoped, tag = 'scratch operand']
  #allocation3 [shape = 'f32[16,128]{1,0:T(8,128)}', space=vmem, size = 0x2000, scoped, tag = 'scratch operand']
  %s0 = inlined_call_operand.vmem [shape: bf16[16,16], index: 0, kind: input, shape index: {}]
  %s1 = inlined_call_operand.vmem [shape: bf16[16,128], index: 1, kind: input, shape index: {}]
  %s2 = inlined_call_operand.hbm [shape: bf16[128,128], index: 2, kind: input, shape index: {}]
  %s3 = inlined_call_operand.vmem [shape: f32[1,128], index: 3, kind: input, shape index: {}]
  %s4 = inlined_call_operand.vmem [shape: bf16[16,128], index: 4, kind: output, shape index: {0}]
  %s5 = inlined_call_operand.vmem [shape: f32[2,128], index: 5, kind: output, shape index: {1}]
  %6 = xla_tuple %s4, %s5
  %s7 = sld [smem:[#allocation0]]
  $region46: #{forward.3} parent=0
    _
  %s9 = ssub.s32 1, %s7
  %s10 = scalar_select 0, %s9, %s7
  $region1: #{forward.3} parent=0
    #allocation4 [shape = 'u8[32768]{0}', space=vmem, size = 0x8000, scoped, tag = 'input window, operand 2, single buffered']
    #allocation5 [shape = 's32[1]{0}', space=sflag, size = 0x4, scoped, tag = 'scoped memory for forward.3']
    %11 = vsyncpa [#allocation5], 0
    // Predicated region
    $region2: #{forward.3} parent=1 // pred_check
      _
    $region3: #{forward.3} parent=1 // pred_check_branch
      %13 = sbr.rel (0) target = $region5
    $region4: #{forward.3} parent=1 // pred_region
      _
    $region5: #{forward.3} parent=1 // pred_fallthru
      _
    // Predicated region
    $region6: #{forward.3} parent=1 // pred_check
      _
    $region7: #{forward.3} parent=1 // pred_check_branch
      %15 = sbr.rel (0) target = $region9
    $region8: #{forward.3} parent=1 // pred_region
      _
    $region9: #{forward.3} parent=1 // pred_fallthru
      _
    // Predicated region
    $region10: #{forward.3} parent=1 // pred_check
      _
    $region11: #{forward.3} parent=1 // pred_check_branch
      %17 = sbr.rel (0) target = $region13
    $region12: #{forward.3} parent=1 // pred_region
      %19 = vsyncadd [#allocation5], 0
      %s20 = sshll.u32 %s2, 4
      %s21 = int_to_ptr.hbm [resolvable:$true] %s20
      %s22 = sshll.u32 [#allocation4], 4
      %s23 = int_to_ptr.vmem [resolvable:$true] %s22
      %28 = dma.hbm_to_vmem [thread:$0]  %s21, 1024, %s23, [#allocation5], 64, 64, 4
    $region13: #{forward.3} parent=1 // pred_fallthru
      _
    // Predicated region
    $region14: #{forward.3} parent=1 // pred_check
      _
    $region15: #{forward.3} parent=1 // pred_check_branch
      %30 = sbr.rel (0) target = $region17
    $region16: #{forward.3} parent=1 // pred_region
      _
    $region17: #{forward.3} parent=1 // pred_fallthru
      _
    // Predicated region
    $region18: #{forward.3} parent=1 // pred_check
      _
    $region19: #{forward.3} parent=1 // pred_check_branch
      %32 = sbr.rel (0) target = $region21
    $region20: #{forward.3} parent=1 // pred_region
      %34 = dma.done [#allocation5], 1024
    $region21: #{forward.3} parent=1 // pred_fallthru
      _
    %v36 = vld [vmem:[%s0] sm:$0xf]
    %v37 = vld [vmem:[%s0 + $0x4] sm:$0xf]
    %v38 = vld [vmem:[%s1] sm:$0xf]
    %v39 = vld [vmem:[%s1 + $0x4] sm:$0xf]
    %v40 = vld [vmem:[%s3] sm:$0x1]
    %v42 = vperm.slane %v40, 0
    %v46 = vunpack.c.l.b16 %v36
    %v47 = vunpack.c.l.b16 %v37
    %v48 = vpack.c.b16 %v47, %v46
    %v51 = vunpack.c.l.b16 %v38
    %v52 = vunpack.c.l.b16 %v39
    %v53 = vpack.c.b16 %v52, %v51
    %vm55 = vcmask 130048
    %v57 = vsel %vm55, %v48, 0
    %59 = vmatpush.bf16.msra.mxu0 0
    %60 = vmatpush.bf16.msra.mxu0 0
    %61 = vmatpush.bf16.msra.mxu0 0
    %62 = vmatpush.bf16.msra.mxu0 0
    %63 = vmatpush.bf16.msra.mxu0 0
    %64 = vmatpush.bf16.msra.mxu0 0
    %65 = vmatpush.bf16.msra.mxu0 0
    %66 = vmatpush.bf16.msra.mxu0 %v53
    %67 = vmatmul.bf16.gmra.mxu0 %v57
    %v68 = vpop.f32.mrf.mxu0
    %v69 = vadd.f32 %v42, %v68
    %v70 = vpop.f32.mrf.mxu0
    %v71 = vadd.f32 %v42, %v70
    %72 = vdwg.mxu0
    %73 = vst [vmem:[#allocation3] sm:$0xff] %v69
    %74 = vst [vmem:[#allocation3 + $0x8] sm:$0xff] %v71
    %p75 = scmp.eq.s32.totalorder 0, 0
    // Predicated region
    $region22: #{forward.3} parent=1 // pred_check
      %p76 = pneg %p75
    $region23: #{forward.3} parent=1 // pred_check_branch
      %78 = sbr.rel (%p76) target = $region25
    $region24: #{forward.3} parent=1 // pred_region
      %79 = vst [vmem:[#allocation2] sm:$0x3] 0.0
    $region25: #{forward.3} parent=1 // pred_fallthru
      _
    %v80 = vld [vmem:[#allocation2] sm:$0x3]
    %v81 = vld [vmem:[#allocation3] sm:$0x3]
    %v82 = vpack.c.bf16 %v80, %v80
    %v83 = vld [vmem:[#allocation4] sm:$0xf]
    %v84 = vld [vmem:[#allocation4 + $0x4] sm:$0xf]
    %v85 = vld [vmem:[#allocation4 + $0x8] sm:$0xf]
    %v86 = vld [vmem:[#allocation4 + $0xc] sm:$0xf]
    %v87 = vld [vmem:[#allocation4 + $0x10] sm:$0xf]
    %v88 = vld [vmem:[#allocation4 + $0x14] sm:$0xf]
    %v89 = vld [vmem:[#allocation4 + $0x18] sm:$0xf]
    %v90 = vld [vmem:[#allocation4 + $0x1c] sm:$0xf]
    %v91 = vld [vmem:[#allocation4 + $0x20] sm:$0xf]
    %v92 = vld [vmem:[#allocation4 + $0x24] sm:$0xf]
    %v93 = vld [vmem:[#allocation4 + $0x28] sm:$0xf]
    %v94 = vld [vmem:[#allocation4 + $0x2c] sm:$0xf]
    %v95 = vld [vmem:[#allocation4 + $0x30] sm:$0xf]
    %v96 = vld [vmem:[#allocation4 + $0x34] sm:$0xf]
    %v97 = vld [vmem:[#allocation4 + $0x38] sm:$0xf]
    %v98 = vld [vmem:[#allocation4 + $0x3c] sm:$0xf]
    %v115 = vunpack.c.l.b16 %v83
    %v116 = vunpack.c.l.b16 %v84
    %v117 = vunpack.c.l.b16 %v85
    %v118 = vunpack.c.l.b16 %v86
    %v119 = vunpack.c.l.b16 %v87
    %v120 = vunpack.c.l.b16 %v88
    %v121 = vunpack.c.l.b16 %v89
    %v122 = vunpack.c.l.b16 %v90
    %v123 = vunpack.c.l.b16 %v91
    %v124 = vunpack.c.l.b16 %v92
    %v125 = vunpack.c.l.b16 %v93
    %v126 = vunpack.c.l.b16 %v94
    %v127 = vunpack.c.l.b16 %v95
    %v128 = vunpack.c.l.b16 %v96
    %v129 = vunpack.c.l.b16 %v97
    %v130 = vunpack.c.l.b16 %v98
    %v131 = vpack.c.b16 %v116, %v115
    %v132 = vpack.c.b16 %v118, %v117
    %v133 = vpack.c.b16 %v120, %v119
    %v134 = vpack.c.b16 %v122, %v121
    %v135 = vpack.c.b16 %v124, %v123
    %v136 = vpack.c.b16 %v126, %v125
    %v137 = vpack.c.b16 %v128, %v127
    %v138 = vpack.c.b16 %v130, %v129
    %147 = vmatpush.bf16.msra.mxu0 %v138
    %148 = vmatpush.bf16.msra.mxu0 %v137
    %149 = vmatpush.bf16.msra.mxu0 %v136
    %150 = vmatpush.bf16.msra.mxu0 %v135
    %151 = vmatpush.bf16.msra.mxu0 %v134
    %152 = vmatpush.bf16.msra.mxu0 %v133
    %153 = vmatpush.bf16.msra.mxu0 %v132
    %154 = vmatpush.bf16.msra.mxu0 %v131
    %155 = vmatmul.bf16.gmra.mxu0 %v82
    %v156 = vpop.f32.mrf.mxu0
    %v157 = vadd.f32 0.0, %v156
    %v158 = vpop.f32.mrf.mxu0
    %159 = vdwg.mxu0
    %v160 = vadd.f32 %v81, %v157
    %v161 = vtanh.pop %v160
    %v162 = vpack.c.bf16 %v161, %v161
    %163 = vst [vmem:[%s4] sm:$0x1] %v162
    %v164 = vld [vmem:[#allocation3 + $0x2] sm:$0x3]
    %v165 = vld [vmem:[#allocation4] sm:$0xf]
    %v166 = vld [vmem:[#allocation4 + $0x4] sm:$0xf]
    %v167 = vld [vmem:[#allocation4 + $0x8] sm:$0xf]
    %v168 = vld [vmem:[#allocation4 + $0xc] sm:$0xf]
    %v169 = vld [vmem:[#allocation4 + $0x10] sm:$0xf]
    %v170 = vld [vmem:[#allocation4 + $0x14] sm:$0xf]
    %v171 = vld [vmem:[#allocation4 + $0x18] sm:$0xf]
    %v172 = vld [vmem:[#allocation4 + $0x1c] sm:$0xf]
    %v173 = vld [vmem:[#allocation4 + $0x20] sm:$0xf]
    %v174 = vld [vmem:[#allocation4 + $0x24] sm:$0xf]
    %v175 = vld [vmem:[#allocation4 + $0x28] sm:$0xf]
    %v176 = vld [vmem:[#allocation4 + $0x2c] sm:$0xf]
    %v177 = vld [vmem:[#allocation4 + $0x30] sm:$0xf]
    %v178 = vld [vmem:[#allocation4 + $0x34] sm:$0xf]
    %v179 = vld [vmem:[#allocation4 + $0x38] sm:$0xf]
    %v180 = vld [vmem:[#allocation4 + $0x3c] sm:$0xf]
    %v197 = vunpack.c.l.b16 %v165
    %v198 = vunpack.c.l.b16 %v166
    %v199 = vunpack.c.l.b16 %v167
    %v200 = vunpack.c.l.b16 %v168
    %v201 = vunpack.c.l.b16 %v169
    %v202 = vunpack.c.l.b16 %v170
    %v203 = vunpack.c.l.b16 %v171
    %v204 = vunpack.c.l.b16 %v172
    %v205 = vunpack.c.l.b16 %v173
    %v206 = vunpack.c.l.b16 %v174
    %v207 = vunpack.c.l.b16 %v175
    %v208 = vunpack.c.l.b16 %v176
    %v209 = vunpack.c.l.b16 %v177
    %v210 = vunpack.c.l.b16 %v178
    %v211 = vunpack.c.l.b16 %v179
    %v212 = vunpack.c.l.b16 %v180
    %v213 = vpack.c.b16 %v198, %v197
    %v214 = vpack.c.b16 %v200, %v199
    %v215 = vpack.c.b16 %v202, %v201
    %v216 = vpack.c.b16 %v204, %v203
    %v217 = vpack.c.b16 %v206, %v205
    %v218 = vpack.c.b16 %v208, %v207
    %v219 = vpack.c.b16 %v210, %v209
    %v220 = vpack.c.b16 %v212, %v211
    %229 = vmatpush.bf16.msra.mxu0 %v220
    %230 = vmatpush.bf16.msra.mxu0 %v219
    %231 = vmatpush.bf16.msra.mxu0 %v218
    %232 = vmatpush.bf16.msra.mxu0 %v217
    %233 = vmatpush.bf16.msra.mxu0 %v216
    %234 = vmatpush.bf16.msra.mxu0 %v215
    %235 = vmatpush.bf16.msra.mxu0 %v214
    %236 = vmatpush.bf16.msra.mxu0 %v213
    %237 = vmatmul.bf16.gmra.mxu0 %v162
    %v238 = vpop.f32.mrf.mxu0
    %v239 = vadd.f32 0.0, %v238
    %v240 = vpop.f32.mrf.mxu0
    %241 = vdwg.mxu0
    %v242 = vadd.f32 %v164, %v239
    %v243 = vtanh.pop %v242
    %v244 = vpack.c.bf16 %v243, %v243
    %v246 = vrot.slane %v244, 7
    %248 = vst [vmem:[%s4] sm:$0x2] %v246
    %v249 = vld [vmem:[#allocation3 + $0x4] sm:$0x3]
    %v250 = vld [vmem:[#allocation4] sm:$0xf]
    %v251 = vld [vmem:[#allocation4 + $0x4] sm:$0xf]
    %v252 = vld [vmem:[#allocation4 + $0x8] sm:$0xf]
    %v253 = vld [vmem:[#allocation4 + $0xc] sm:$0xf]
    %v254 = vld [vmem:[#allocation4 + $0x10] sm:$0xf]
    %v255 = vld [vmem:[#allocation4 + $0x14] sm:$0xf]
    %v256 = vld [vmem:[#allocation4 + $0x18] sm:$0xf]
    %v257 = vld [vmem:[#allocation4 + $0x1c] sm:$0xf]
    %v258 = vld [vmem:[#allocation4 + $0x20] sm:$0xf]
    %v259 = vld [vmem:[#allocation4 + $0x24] sm:$0xf]
    %v260 = vld [vmem:[#allocation4 + $0x28] sm:$0xf]
    %v261 = vld [vmem:[#allocation4 + $0x2c] sm:$0xf]
    %v262 = vld [vmem:[#allocation4 + $0x30] sm:$0xf]
    %v263 = vld [vmem:[#allocation4 + $0x34] sm:$0xf]
    %v264 = vld [vmem:[#allocation4 + $0x38] sm:$0xf]
    %v265 = vld [vmem:[#allocation4 + $0x3c] sm:$0xf]
    %v282 = vunpack.c.l.b16 %v250
    %v283 = vunpack.c.l.b16 %v251
    %v284 = vunpack.c.l.b16 %v252
    %v285 = vunpack.c.l.b16 %v253
    %v286 = vunpack.c.l.b16 %v254
    %v287 = vunpack.c.l.b16 %v255
    %v288 = vunpack.c.l.b16 %v256
    %v289 = vunpack.c.l.b16 %v257
    %v290 = vunpack.c.l.b16 %v258
    %v291 = vunpack.c.l.b16 %v259
    %v292 = vunpack.c.l.b16 %v260
    %v293 = vunpack.c.l.b16 %v261
    %v294 = vunpack.c.l.b16 %v262
    %v295 = vunpack.c.l.b16 %v263
    %v296 = vunpack.c.l.b16 %v264
    %v297 = vunpack.c.l.b16 %v265
    %v298 = vpack.c.b16 %v283, %v282
    %v299 = vpack.c.b16 %v285, %v284
    %v300 = vpack.c.b16 %v287, %v286
    %v301 = vpack.c.b16 %v289, %v288
    %v302 = vpack.c.b16 %v291, %v290
    %v303 = vpack.c.b16 %v293, %v292
    %v304 = vpack.c.b16 %v295, %v294
    %v305 = vpack.c.b16 %v297, %v296
    %314 = vmatpush.bf16.msra.mxu0 %v305
    %315 = vmatpush.bf16.msra.mxu0 %v304
    %316 = vmatpush.bf16.msra.mxu0 %v303
    %317 = vmatpush.bf16.msra.mxu0 %v302
    %318 = vmatpush.bf16.msra.mxu0 %v301
    %319 = vmatpush.bf16.msra.mxu0 %v300
    %320 = vmatpush.bf16.msra.mxu0 %v299
    %321 = vmatpush.bf16.msra.mxu0 %v298
    %322 = vmatmul.bf16.gmra.mxu0 %v244
    %v323 = vpop.f32.mrf.mxu0
    %v324 = vadd.f32 0.0, %v323
    %v325 = vpop.f32.mrf.mxu0
    %326 = vdwg.mxu0
    %v327 = vadd.f32 %v249, %v324
    %v328 = vtanh.pop %v327
    %v329 = vpack.c.bf16 %v328, %v328
    %v331 = vrot.slane %v329, 6
    %333 = vst [vmem:[%s4] sm:$0x4] %v331
    %v334 = vld [vmem:[#allocation3 + $0x6] sm:$0x3]
    %v335 = vld [vmem:[#allocation4] sm:$0xf]
    %v336 = vld [vmem:[#allocation4 + $0x4] sm:$0xf]
    %v337 = vld [vmem:[#allocation4 + $0x8] sm:$0xf]
    %v338 = vld [vmem:[#allocation4 + $0xc] sm:$0xf]
    %v339 = vld [vmem:[#allocation4 + $0x10] sm:$0xf]
    %v340 = vld [vmem:[#allocation4 + $0x14] sm:$0xf]
    %v341 = vld [vmem:[#allocation4 + $0x18] sm:$0xf]
    %v342 = vld [vmem:[#allocation4 + $0x1c] sm:$0xf]
    %v343 = vld [vmem:[#allocation4 + $0x20] sm:$0xf]
    %v344 = vld [vmem:[#allocation4 + $0x24] sm:$0xf]
    %v345 = vld [vmem:[#allocation4 + $0x28] sm:$0xf]
    %v346 = vld [vmem:[#allocation4 + $0x2c] sm:$0xf]
    %v347 = vld [vmem:[#allocation4 + $0x30] sm:$0xf]
    %v348 = vld [vmem:[#allocation4 + $0x34] sm:$0xf]
    %v349 = vld [vmem:[#allocation4 + $0x38] sm:$0xf]
    %v350 = vld [vmem:[#allocation4 + $0x3c] sm:$0xf]
    %v367 = vunpack.c.l.b16 %v335
    %v368 = vunpack.c.l.b16 %v336
    %v369 = vunpack.c.l.b16 %v337
    %v370 = vunpack.c.l.b16 %v338
    %v371 = vunpack.c.l.b16 %v339
    %v372 = vunpack.c.l.b16 %v340
    %v373 = vunpack.c.l.b16 %v341
    %v374 = vunpack.c.l.b16 %v342
    %v375 = vunpack.c.l.b16 %v343
    %v376 = vunpack.c.l.b16 %v344
    %v377 = vunpack.c.l.b16 %v345
    %v378 = vunpack.c.l.b16 %v346
    %v379 = vunpack.c.l.b16 %v347
    %v380 = vunpack.c.l.b16 %v348
    %v381 = vunpack.c.l.b16 %v349
    %v382 = vunpack.c.l.b16 %v350
    %v383 = vpack.c.b16 %v368, %v367
    %v384 = vpack.c.b16 %v370, %v369
    %v385 = vpack.c.b16 %v372, %v371
    %v386 = vpack.c.b16 %v374, %v373
    %v387 = vpack.c.b16 %v376, %v375
    %v388 = vpack.c.b16 %v378, %v377
    %v389 = vpack.c.b16 %v380, %v379
    %v390 = vpack.c.b16 %v382, %v381
    %399 = vmatpush.bf16.msra.mxu0 %v390
    %400 = vmatpush.bf16.msra.mxu0 %v389
    %401 = vmatpush.bf16.msra.mxu0 %v388
    %402 = vmatpush.bf16.msra.mxu0 %v387
    %403 = vmatpush.bf16.msra.mxu0 %v386
    %404 = vmatpush.bf16.msra.mxu0 %v385
    %405 = vmatpush.bf16.msra.mxu0 %v384
    %406 = vmatpush.bf16.msra.mxu0 %v383
    %407 = vmatmul.bf16.gmra.mxu0 %v329
    %v408 = vpop.f32.mrf.mxu0
    %v409 = vadd.f32 0.0, %v408
    %v410 = vpop.f32.mrf.mxu0
    %411 = vdwg.mxu0
    %v412 = vadd.f32 %v334, %v409
    %v413 = vtanh.pop %v412
    %v414 = vpack.c.bf16 %v413, %v413
    %v416 = vrot.slane %v414, 5
    %418 = vst [vmem:[%s4] sm:$0x8] %v416
    %v419 = vld [vmem:[#allocation3 + $0x8] sm:$0x3]
    %v420 = vld [vmem:[#allocation4] sm:$0xf]
    %v421 = vld [vmem:[#allocation4 + $0x4] sm:$0xf]
    %v422 = vld [vmem:[#allocation4 + $0x8] sm:$0xf]
    %v423 = vld [vmem:[#allocation4 + $0xc] sm:$0xf]
    %v424 = vld [vmem:[#allocation4 + $0x10] sm:$0xf]
    %v425 = vld [vmem:[#allocation4 + $0x14] sm:$0xf]
    %v426 = vld [vmem:[#allocation4 + $0x18] sm:$0xf]
    %v427 = vld [vmem:[#allocation4 + $0x1c] sm:$0xf]
    %v428 = vld [vmem:[#allocation4 + $0x20] sm:$0xf]
    %v429 = vld [vmem:[#allocation4 + $0x24] sm:$0xf]
    %v430 = vld [vmem:[#allocation4 + $0x28] sm:$0xf]
    %v431 = vld [vmem:[#allocation4 + $0x2c] sm:$0xf]
    %v432 = vld [vmem:[#allocation4 + $0x30] sm:$0xf]
    %v433 = vld [vmem:[#allocation4 + $0x34] sm:$0xf]
    %v434 = vld [vmem:[#allocation4 + $0x38] sm:$0xf]
    %v435 = vld [vmem:[#allocation4 + $0x3c] sm:$0xf]
    %v452 = vunpack.c.l.b16 %v420
    %v453 = vunpack.c.l.b16 %v421
    %v454 = vunpack.c.l.b16 %v422
    %v455 = vunpack.c.l.b16 %v423
    %v456 = vunpack.c.l.b16 %v424
    %v457 = vunpack.c.l.b16 %v425
    %v458 = vunpack.c.l.b16 %v426
    %v459 = vunpack.c.l.b16 %v427
    %v460 = vunpack.c.l.b16 %v428
    %v461 = vunpack.c.l.b16 %v429
    %v462 = vunpack.c.l.b16 %v430
    %v463 = vunpack.c.l.b16 %v431
    %v464 = vunpack.c.l.b16 %v432
    %v465 = vunpack.c.l.b16 %v433
    %v466 = vunpack.c.l.b16 %v434
    %v467 = vunpack.c.l.b16 %v435
    %v468 = vpack.c.b16 %v453, %v452
    %v469 = vpack.c.b16 %v455, %v454
    %v470 = vpack.c.b16 %v457, %v456
    %v471 = vpack.c.b16 %v459, %v458
    %v472 = vpack.c.b16 %v461, %v460
    %v473 = vpack.c.b16 %v463, %v462
    %v474 = vpack.c.b16 %v465, %v464
    %v475 = vpack.c.b16 %v467, %v466
    %484 = vmatpush.bf16.msra.mxu0 %v475
    %485 = vmatpush.bf16.msra.mxu0 %v474
    %486 = vmatpush.bf16.msra.mxu0 %v473
    %487 = vmatpush.bf16.msra.mxu0 %v472
    %488 = vmatpush.bf16.msra.mxu0 %v471
    %489 = vmatpush.bf16.msra.mxu0 %v470
    %490 = vmatpush.bf16.msra.mxu0 %v469
    %491 = vmatpush.bf16.msra.mxu0 %v468
    %492 = vmatmul.bf16.gmra.mxu0 %v414
    %v493 = vpop.f32.mrf.mxu0
    %v494 = vadd.f32 0.0, %v493
    %v495 = vpop.f32.mrf.mxu0
    %496 = vdwg.mxu0
    %v497 = vadd.f32 %v419, %v494
    %v498 = vtanh.pop %v497
    %v499 = vpack.c.bf16 %v498, %v498
    %500 = vst [vmem:[%s4 + $0x4] sm:$0x1] %v499
    %v501 = vld [vmem:[#allocation3 + $0xa] sm:$0x3]
    %v502 = vld [vmem:[#allocation4] sm:$0xf]
    %v503 = vld [vmem:[#allocation4 + $0x4] sm:$0xf]
    %v504 = vld [vmem:[#allocation4 + $0x8] sm:$0xf]
    %v505 = vld [vmem:[#allocation4 + $0xc] sm:$0xf]
    %v506 = vld [vmem:[#allocation4 + $0x10] sm:$0xf]
    %v507 = vld [vmem:[#allocation4 + $0x14] sm:$0xf]
    %v508 = vld [vmem:[#allocation4 + $0x18] sm:$0xf]
    %v509 = vld [vmem:[#allocation4 + $0x1c] sm:$0xf]
    %v510 = vld [vmem:[#allocation4 + $0x20] sm:$0xf]
    %v511 = vld [vmem:[#allocation4 + $0x24] sm:$0xf]
    %v512 = vld [vmem:[#allocation4 + $0x28] sm:$0xf]
    %v513 = vld [vmem:[#allocation4 + $0x2c] sm:$0xf]
    %v514 = vld [vmem:[#allocation4 + $0x30] sm:$0xf]
    %v515 = vld [vmem:[#allocation4 + $0x34] sm:$0xf]
    %v516 = vld [vmem:[#allocation4 + $0x38] sm:$0xf]
    %v517 = vld [vmem:[#allocation4 + $0x3c] sm:$0xf]
    %v534 = vunpack.c.l.b16 %v502
    %v535 = vunpack.c.l.b16 %v503
    %v536 = vunpack.c.l.b16 %v504
    %v537 = vunpack.c.l.b16 %v505
    %v538 = vunpack.c.l.b16 %v506
    %v539 = vunpack.c.l.b16 %v507
    %v540 = vunpack.c.l.b16 %v508
    %v541 = vunpack.c.l.b16 %v509
    %v542 = vunpack.c.l.b16 %v510
    %v543 = vunpack.c.l.b16 %v511
    %v544 = vunpack.c.l.b16 %v512
    %v545 = vunpack.c.l.b16 %v513
    %v546 = vunpack.c.l.b16 %v514
    %v547 = vunpack.c.l.b16 %v515
    %v548 = vunpack.c.l.b16 %v516
    %v549 = vunpack.c.l.b16 %v517
    %v550 = vpack.c.b16 %v535, %v534
    %v551 = vpack.c.b16 %v537, %v536
    %v552 = vpack.c.b16 %v539, %v538
    %v553 = vpack.c.b16 %v541, %v540
    %v554 = vpack.c.b16 %v543, %v542
    %v555 = vpack.c.b16 %v545, %v544
    %v556 = vpack.c.b16 %v547, %v546
    %v557 = vpack.c.b16 %v549, %v548
    %566 = vmatpush.bf16.msra.mxu0 %v557
    %567 = vmatpush.bf16.msra.mxu0 %v556
    %568 = vmatpush.bf16.msra.mxu0 %v555
    %569 = vmatpush.bf16.msra.mxu0 %v554
    %570 = vmatpush.bf16.msra.mxu0 %v553
    %571 = vmatpush.bf16.msra.mxu0 %v552
    %572 = vmatpush.bf16.msra.mxu0 %v551
    %573 = vmatpush.bf16.msra.mxu0 %v550
    %574 = vmatmul.bf16.gmra.mxu0 %v499
    %v575 = vpop.f32.mrf.mxu0
    %v576 = vadd.f32 0.0, %v575
    %v577 = vpop.f32.mrf.mxu0
    %578 = vdwg.mxu0
    %v579 = vadd.f32 %v501, %v576
    %v580 = vtanh.pop %v579
    %v581 = vpack.c.bf16 %v580, %v580
    %v583 = vrot.slane %v581, 7
    %585 = vst [vmem:[%s4 + $0x4] sm:$0x2] %v583
    %v586 = vld [vmem:[#allocation3 + $0xc] sm:$0x3]
    %v587 = vld [vmem:[#allocation4] sm:$0xf]
    %v588 = vld [vmem:[#allocation4 + $0x4] sm:$0xf]
    %v589 = vld [vmem:[#allocation4 + $0x8] sm:$0xf]
    %v590 = vld [vmem:[#allocation4 + $0xc] sm:$0xf]
    %v591 = vld [vmem:[#allocation4 + $0x10] sm:$0xf]
    %v592 = vld [vmem:[#allocation4 + $0x14] sm:$0xf]
    %v593 = vld [vmem:[#allocation4 + $0x18] sm:$0xf]
    %v594 = vld [vmem:[#allocation4 + $0x1c] sm:$0xf]
    %v595 = vld [vmem:[#allocation4 + $0x20] sm:$0xf]
    %v596 = vld [vmem:[#allocation4 + $0x24] sm:$0xf]
    %v597 = vld [vmem:[#allocation4 + $0x28] sm:$0xf]
    %v598 = vld [vmem:[#allocation4 + $0x2c] sm:$0xf]
    %v599 = vld [vmem:[#allocation4 + $0x30] sm:$0xf]
    %v600 = vld [vmem:[#allocation4 + $0x34] sm:$0xf]
    %v601 = vld [vmem:[#allocation4 + $0x38] sm:$0xf]
    %v602 = vld [vmem:[#allocation4 + $0x3c] sm:$0xf]
    %v619 = vunpack.c.l.b16 %v587
    %v620 = vunpack.c.l.b16 %v588
    %v621 = vunpack.c.l.b16 %v589
    %v622 = vunpack.c.l.b16 %v590
    %v623 = vunpack.c.l.b16 %v591
    %v624 = vunpack.c.l.b16 %v592
    %v625 = vunpack.c.l.b16 %v593
    %v626 = vunpack.c.l.b16 %v594
    %v627 = vunpack.c.l.b16 %v595
    %v628 = vunpack.c.l.b16 %v596
    %v629 = vunpack.c.l.b16 %v597
    %v630 = vunpack.c.l.b16 %v598
    %v631 = vunpack.c.l.b16 %v599
    %v632 = vunpack.c.l.b16 %v600
    %v633 = vunpack.c.l.b16 %v601
    %v634 = vunpack.c.l.b16 %v602
    %v635 = vpack.c.b16 %v620, %v619
    %v636 = vpack.c.b16 %v622, %v621
    %v637 = vpack.c.b16 %v624, %v623
    %v638 = vpack.c.b16 %v626, %v625
    %v639 = vpack.c.b16 %v628, %v627
    %v640 = vpack.c.b16 %v630, %v629
    %v641 = vpack.c.b16 %v632, %v631
    %v642 = vpack.c.b16 %v634, %v633
    %651 = vmatpush.bf16.msra.mxu0 %v642
    %652 = vmatpush.bf16.msra.mxu0 %v641
    %653 = vmatpush.bf16.msra.mxu0 %v640
    %654 = vmatpush.bf16.msra.mxu0 %v639
    %655 = vmatpush.bf16.msra.mxu0 %v638
    %656 = vmatpush.bf16.msra.mxu0 %v637
    %657 = vmatpush.bf16.msra.mxu0 %v636
    %658 = vmatpush.bf16.msra.mxu0 %v635
    %659 = vmatmul.bf16.gmra.mxu0 %v581
    %v660 = vpop.f32.mrf.mxu0
    %v661 = vadd.f32 0.0, %v660
    %v662 = vpop.f32.mrf.mxu0
    %663 = vdwg.mxu0
    %v664 = vadd.f32 %v586, %v661
    %v665 = vtanh.pop %v664
    %v666 = vpack.c.bf16 %v665, %v665
    %v668 = vrot.slane %v666, 6
    %670 = vst [vmem:[%s4 + $0x4] sm:$0x4] %v668
    %v671 = vld [vmem:[#allocation3 + $0xe] sm:$0x3]
    %v672 = vld [vmem:[#allocation4] sm:$0xf]
    %v673 = vld [vmem:[#allocation4 + $0x4] sm:$0xf]
    %v674 = vld [vmem:[#allocation4 + $0x8] sm:$0xf]
    %v675 = vld [vmem:[#allocation4 + $0xc] sm:$0xf]
    %v676 = vld [vmem:[#allocation4 + $0x10] sm:$0xf]
    %v677 = vld [vmem:[#allocation4 + $0x14] sm:$0xf]
    %v678 = vld [vmem:[#allocation4 + $0x18] sm:$0xf]
    %v679 = vld [vmem:[#allocation4 + $0x1c] sm:$0xf]
    %v680 = vld [vmem:[#allocation4 + $0x20] sm:$0xf]
    %v681 = vld [vmem:[#allocation4 + $0x24] sm:$0xf]
    %v682 = vld [vmem:[#allocation4 + $0x28] sm:$0xf]
    %v683 = vld [vmem:[#allocation4 + $0x2c] sm:$0xf]
    %v684 = vld [vmem:[#allocation4 + $0x30] sm:$0xf]
    %v685 = vld [vmem:[#allocation4 + $0x34] sm:$0xf]
    %v686 = vld [vmem:[#allocation4 + $0x38] sm:$0xf]
    %v687 = vld [vmem:[#allocation4 + $0x3c] sm:$0xf]
    %v704 = vunpack.c.l.b16 %v672
    %v705 = vunpack.c.l.b16 %v673
    %v706 = vunpack.c.l.b16 %v674
    %v707 = vunpack.c.l.b16 %v675
    %v708 = vunpack.c.l.b16 %v676
    %v709 = vunpack.c.l.b16 %v677
    %v710 = vunpack.c.l.b16 %v678
    %v711 = vunpack.c.l.b16 %v679
    %v712 = vunpack.c.l.b16 %v680
    %v713 = vunpack.c.l.b16 %v681
    %v714 = vunpack.c.l.b16 %v682
    %v715 = vunpack.c.l.b16 %v683
    %v716 = vunpack.c.l.b16 %v684
    %v717 = vunpack.c.l.b16 %v685
    %v718 = vunpack.c.l.b16 %v686
    %v719 = vunpack.c.l.b16 %v687
    %v720 = vpack.c.b16 %v705, %v704
    %v721 = vpack.c.b16 %v707, %v706
    %v722 = vpack.c.b16 %v709, %v708
    %v723 = vpack.c.b16 %v711, %v710
    %v724 = vpack.c.b16 %v713, %v712
    %v725 = vpack.c.b16 %v715, %v714
    %v726 = vpack.c.b16 %v717, %v716
    %v727 = vpack.c.b16 %v719, %v718
    %736 = vmatpush.bf16.msra.mxu0 %v727
    %737 = vmatpush.bf16.msra.mxu0 %v726
    %738 = vmatpush.bf16.msra.mxu0 %v725
    %739 = vmatpush.bf16.msra.mxu0 %v724
    %740 = vmatpush.bf16.msra.mxu0 %v723
    %741 = vmatpush.bf16.msra.mxu0 %v722
    %742 = vmatpush.bf16.msra.mxu0 %v721
    %743 = vmatpush.bf16.msra.mxu0 %v720
    %744 = vmatmul.bf16.gmra.mxu0 %v666
    %v745 = vpop.f32.mrf.mxu0
    %v746 = vadd.f32 0.0, %v745
    %v747 = vpop.f32.mrf.mxu0
    %748 = vdwg.mxu0
    %v749 = vadd.f32 %v671, %v746
    %v750 = vtanh.pop %v749
    %v751 = vpack.c.bf16 %v750, %v750
    %v753 = vrot.slane %v751, 5
    %755 = vst [vmem:[%s4 + $0x4] sm:$0x8] %v753
    %756 = vst [vmem:[#allocation2] sm:$0x3] %v750
    // Predicated region
    $region26: #{forward.3} parent=1 // pred_check
      %p757 = pneg %p75
    $region27: #{forward.3} parent=1 // pred_check_branch
      %759 = sbr.rel (%p757) target = $region29
    $region28: #{forward.3} parent=1 // pred_region
      %760 = vst [vmem:[%s5] sm:$0x3] %v750
    $region29: #{forward.3} parent=1 // pred_fallthru
      _
    // Predicated region
    $region30: #{forward.3} parent=1 // pred_check
      _
    $region31: #{forward.3} parent=1 // pred_check_branch
      %762 = sbr.rel (0) target = $region33
    $region32: #{forward.3} parent=1 // pred_region
      _
    $region33: #{forward.3} parent=1 // pred_fallthru
      _
    // Predicated region
    $region34: #{forward.3} parent=1 // pred_check
      _
    $region35: #{forward.3} parent=1 // pred_check_branch
      %764 = sbr.rel (0) target = $region37
    $region36: #{forward.3} parent=1 // pred_region
      _
    $region37: #{forward.3} parent=1 // pred_fallthru
      _
    // Predicated region
    $region38: #{forward.3} parent=1 // pred_check
      _
    $region39: #{forward.3} parent=1 // pred_check_branch
      %766 = sbr.rel (0) target = $region41
    $region40: #{forward.3} parent=1 // pred_region
      _
    $region41: #{forward.3} parent=1 // pred_fallthru
      _
    // Predicated region
    $region42: #{forward.3} parent=1 // pred_check
      _
    $region43: #{forward.3} parent=1 // pred_check_branch
      %768 = sbr.rel (0) target = $region45
    $region44: #{forward.3} parent=1 // pred_region
      _
    $region45: #{forward.3} parent=1 // pred_fallthru
      _
    %769 = vsyncpa [#allocation5], 1

// kernel: forward.4
$region0: #{forward.4}
  #allocation0 [shape = 'u32[]', space=smem, size = 0x4, offset = 0x4, fixed_abs, tag = 'smem constant byte address 0x4 - core index']
  #allocation1 [shape = 'u32[72,128]{1,0:T(1,128)}', space=vmem, size = 0x9000, scoped, tag = 'internal scratch']
  #allocation2 [shape = 'f32[2,128]{1,0:T(2,128)}', space=vmem, size = 0x400, scoped, tag = 'scratch operand']
  #allocation3 [shape = 'f32[16,128]{1,0:T(8,128)}', space=vmem, size = 0x2000, scoped, tag = 'scratch operand']
  %s0 = inlined_call_operand.vmem [shape: bf16[16,128], index: 0, kind: input, shape index: {}]
  %s1 = inlined_call_operand.hbm [shape: bf16[128,128], index: 1, kind: input, shape index: {}]
  %s2 = inlined_call_operand.hbm [shape: bf16[128,128], index: 2, kind: input, shape index: {}]
  %s3 = inlined_call_operand.vmem [shape: f32[1,128], index: 3, kind: input, shape index: {}]
  %s4 = inlined_call_operand.vmem [shape: bf16[16,128], index: 4, kind: output, shape index: {0}]
  %s5 = inlined_call_operand.vmem [shape: f32[2,128], index: 5, kind: output, shape index: {1}]
  %6 = xla_tuple %s4, %s5
  %s7 = sld [smem:[#allocation0]]
  $region50: #{forward.4} parent=0
    _
  %s9 = ssub.s32 1, %s7
  %s10 = scalar_select 0, %s9, %s7
  $region1: #{forward.4} parent=0
    #allocation4 [shape = 'u8[32768]{0}', space=vmem, size = 0x8000, scoped, tag = 'input window, operand 1, single buffered']
    #allocation5 [shape = 's32[1]{0}', space=sflag, size = 0x4, scoped, tag = 'scoped memory for forward.4']
    #allocation6 [shape = 'u8[32768]{0}', space=vmem, size = 0x8000, scoped, tag = 'input window, operand 2, single buffered']
    #allocation7 [shape = 's32[1]{0}', space=sflag, size = 0x4, scoped, tag = 'scoped memory for forward.4']
    %11 = vsyncpa [#allocation5], 0
    %12 = vsyncpa [#allocation7], 0
    // Predicated region
    $region2: #{forward.4} parent=1 // pred_check
      _
    $region3: #{forward.4} parent=1 // pred_check_branch
      %14 = sbr.rel (0) target = $region5
    $region4: #{forward.4} parent=1 // pred_region
      _
    $region5: #{forward.4} parent=1 // pred_fallthru
      _
    // Predicated region
    $region6: #{forward.4} parent=1 // pred_check
      _
    $region7: #{forward.4} parent=1 // pred_check_branch
      %16 = sbr.rel (0) target = $region9
    $region8: #{forward.4} parent=1 // pred_region
      %18 = vsyncadd [#allocation5], 0
      %s19 = sshll.u32 %s1, 4
      %s20 = int_to_ptr.hbm [resolvable:$true] %s19
      %s21 = sshll.u32 [#allocation4], 4
      %s22 = int_to_ptr.vmem [resolvable:$true] %s21
      %27 = dma.hbm_to_vmem [thread:$0]  %s20, 1024, %s22, [#allocation5], 64, 64, 4
    $region9: #{forward.4} parent=1 // pred_fallthru
      _
    // Predicated region
    $region10: #{forward.4} parent=1 // pred_check
      _
    $region11: #{forward.4} parent=1 // pred_check_branch
      %29 = sbr.rel (0) target = $region13
    $region12: #{forward.4} parent=1 // pred_region
      %31 = vsyncadd [#allocation7], 0
      %s32 = sshll.u32 %s2, 4
      %s33 = int_to_ptr.hbm [resolvable:$true] %s32
      %s34 = sshll.u32 [#allocation6], 4
      %s35 = int_to_ptr.vmem [resolvable:$true] %s34
      %40 = dma.hbm_to_vmem [thread:$0]  %s33, 1024, %s35, [#allocation7], 64, 64, 4
    $region13: #{forward.4} parent=1 // pred_fallthru
      _
    // Predicated region
    $region14: #{forward.4} parent=1 // pred_check
      _
    $region15: #{forward.4} parent=1 // pred_check_branch
      %42 = sbr.rel (0) target = $region17
    $region16: #{forward.4} parent=1 // pred_region
      _
    $region17: #{forward.4} parent=1 // pred_fallthru
      _
    // Predicated region
    $region18: #{forward.4} parent=1 // pred_check
      _
    $region19: #{forward.4} parent=1 // pred_check_branch
      %44 = sbr.rel (0) target = $region21
    $region20: #{forward.4} parent=1 // pred_region
      %46 = dma.done [#allocation5], 1024
    $region21: #{forward.4} parent=1 // pred_fallthru
      _
    // Predicated region
    $region22: #{forward.4} parent=1 // pred_check
      _
    $region23: #{forward.4} parent=1 // pred_check_branch
      %48 = sbr.rel (0) target = $region25
    $region24: #{forward.4} parent=1 // pred_region
      %50 = dma.done [#allocation7], 1024
    $region25: #{forward.4} parent=1 // pred_fallthru
      _
    %v51 = vld [vmem:[%s0] sm:$0xf]
    %v52 = vld [vmem:[%s0 + $0x4] sm:$0xf]
    %v53 = vld [vmem:[#allocation4] sm:$0xf]
    %v54 = vld [vmem:[#allocation4 + $0x4] sm:$0xf]
    %v55 = vld [vmem:[#allocation4 + $0x8] sm:$0xf]
    %v56 = vld [vmem:[#allocation4 + $0xc] sm:$0xf]
    %v57 = vld [vmem:[#allocation4 + $0x10] sm:$0xf]
    %v58 = vld [vmem:[#allocation4 + $0x14] sm:$0xf]
    %v59 = vld [vmem:[#allocation4 + $0x18] sm:$0xf]
    %v60 = vld [vmem:[#allocation4 + $0x1c] sm:$0xf]
    %v61 = vld [vmem:[#allocation4 + $0x20] sm:$0xf]
    %v62 = vld [vmem:[#allocation4 + $0x24] sm:$0xf]
    %v63 = vld [vmem:[#allocation4 + $0x28] sm:$0xf]
    %v64 = vld [vmem:[#allocation4 + $0x2c] sm:$0xf]
    %v65 = vld [vmem:[#allocation4 + $0x30] sm:$0xf]
    %v66 = vld [vmem:[#allocation4 + $0x34] sm:$0xf]
    %v67 = vld [vmem:[#allocation4 + $0x38] sm:$0xf]
    %v68 = vld [vmem:[#allocation4 + $0x3c] sm:$0xf]
    %v69 = vld [vmem:[%s3] sm:$0x1]
    %v71 = vperm.slane %v69, 0
    %v75 = vunpack.c.l.b16 %v51
    %v76 = vunpack.c.l.b16 %v52
    %v77 = vpack.c.b16 %v76, %v75
    %v95 = vunpack.c.l.b16 %v53
    %v96 = vunpack.c.l.b16 %v54
    %v97 = vunpack.c.l.b16 %v55
    %v98 = vunpack.c.l.b16 %v56
    %v99 = vunpack.c.l.b16 %v57
    %v100 = vunpack.c.l.b16 %v58
    %v101 = vunpack.c.l.b16 %v59
    %v102 = vunpack.c.l.b16 %v60
    %v103 = vunpack.c.l.b16 %v61
    %v104 = vunpack.c.l.b16 %v62
    %v105 = vunpack.c.l.b16 %v63
    %v106 = vunpack.c.l.b16 %v64
    %v107 = vunpack.c.l.b16 %v65
    %v108 = vunpack.c.l.b16 %v66
    %v109 = vunpack.c.l.b16 %v67
    %v110 = vunpack.c.l.b16 %v68
    %v111 = vpack.c.b16 %v96, %v95
    %v112 = vpack.c.b16 %v98, %v97
    %v113 = vpack.c.b16 %v100, %v99
    %v114 = vpack.c.b16 %v102, %v101
    %v115 = vpack.c.b16 %v104, %v103
    %v116 = vpack.c.b16 %v106, %v105
    %v117 = vpack.c.b16 %v108, %v107
    %v118 = vpack.c.b16 %v110, %v109
    %127 = vmatpush.bf16.msra.mxu0 %v118
    %128 = vmatpush.bf16.msra.mxu0 %v117
    %129 = vmatpush.bf16.msra.mxu0 %v116
    %130 = vmatpush.bf16.msra.mxu0 %v115
    %131 = vmatpush.bf16.msra.mxu0 %v114
    %132 = vmatpush.bf16.msra.mxu0 %v113
    %133 = vmatpush.bf16.msra.mxu0 %v112
    %134 = vmatpush.bf16.msra.mxu0 %v111
    %135 = vmatmul.bf16.gmra.mxu0 %v77
    %v136 = vpop.f32.mrf.mxu0
    %v137 = vadd.f32 %v71, %v136
    %v138 = vpop.f32.mrf.mxu0
    %v139 = vadd.f32 %v71, %v138
    %140 = vdwg.mxu0
    %141 = vst [vmem:[#allocation3] sm:$0xff] %v137
    %142 = vst [vmem:[#allocation3 + $0x8] sm:$0xff] %v139
    %p143 = scmp.eq.s32.totalorder 0, 0
    // Predicated region
    $region26: #{forward.4} parent=1 // pred_check
      %p144 = pneg %p143
    $region27: #{forward.4} parent=1 // pred_check_branch
      %146 = sbr.rel (%p144) target = $region29
    $region28: #{forward.4} parent=1 // pred_region
      %147 = vst [vmem:[#allocation2] sm:$0x3] 0.0
    $region29: #{forward.4} parent=1 // pred_fallthru
      _
    %v148 = vld [vmem:[#allocation2] sm:$0x3]
    %v149 = vld [vmem:[#allocation3] sm:$0x3]
    %v150 = vpack.c.bf16 %v148, %v148
    %v151 = vld [vmem:[#allocation6] sm:$0xf]
    %v152 = vld [vmem:[#allocation6 + $0x4] sm:$0xf]
    %v153 = vld [vmem:[#allocation6 + $0x8] sm:$0xf]
    %v154 = vld [vmem:[#allocation6 + $0xc] sm:$0xf]
    %v155 = vld [vmem:[#allocation6 + $0x10] sm:$0xf]
    %v156 = vld [vmem:[#allocation6 + $0x14] sm:$0xf]
    %v157 = vld [vmem:[#allocation6 + $0x18] sm:$0xf]
    %v158 = vld [vmem:[#allocation6 + $0x1c] sm:$0xf]
    %v159 = vld [vmem:[#allocation6 + $0x20] sm:$0xf]
    %v160 = vld [vmem:[#allocation6 + $0x24] sm:$0xf]
    %v161 = vld [vmem:[#allocation6 + $0x28] sm:$0xf]
    %v162 = vld [vmem:[#allocation6 + $0x2c] sm:$0xf]
    %v163 = vld [vmem:[#allocation6 + $0x30] sm:$0xf]
    %v164 = vld [vmem:[#allocation6 + $0x34] sm:$0xf]
    %v165 = vld [vmem:[#allocation6 + $0x38] sm:$0xf]
    %v166 = vld [vmem:[#allocation6 + $0x3c] sm:$0xf]
    %v183 = vunpack.c.l.b16 %v151
    %v184 = vunpack.c.l.b16 %v152
    %v185 = vunpack.c.l.b16 %v153
    %v186 = vunpack.c.l.b16 %v154
    %v187 = vunpack.c.l.b16 %v155
    %v188 = vunpack.c.l.b16 %v156
    %v189 = vunpack.c.l.b16 %v157
    %v190 = vunpack.c.l.b16 %v158
    %v191 = vunpack.c.l.b16 %v159
    %v192 = vunpack.c.l.b16 %v160
    %v193 = vunpack.c.l.b16 %v161
    %v194 = vunpack.c.l.b16 %v162
    %v195 = vunpack.c.l.b16 %v163
    %v196 = vunpack.c.l.b16 %v164
    %v197 = vunpack.c.l.b16 %v165
    %v198 = vunpack.c.l.b16 %v166
    %v199 = vpack.c.b16 %v184, %v183
    %v200 = vpack.c.b16 %v186, %v185
    %v201 = vpack.c.b16 %v188, %v187
    %v202 = vpack.c.b16 %v190, %v189
    %v203 = vpack.c.b16 %v192, %v191
    %v204 = vpack.c.b16 %v194, %v193
    %v205 = vpack.c.b16 %v196, %v195
    %v206 = vpack.c.b16 %v198, %v197
    %215 = vmatpush.bf16.msra.mxu0 %v206
    %216 = vmatpush.bf16.msra.mxu0 %v205
    %217 = vmatpush.bf16.msra.mxu0 %v204
    %218 = vmatpush.bf16.msra.mxu0 %v203
    %219 = vmatpush.bf16.msra.mxu0 %v202
    %220 = vmatpush.bf16.msra.mxu0 %v201
    %221 = vmatpush.bf16.msra.mxu0 %v200
    %222 = vmatpush.bf16.msra.mxu0 %v199
    %223 = vmatmul.bf16.gmra.mxu0 %v150
    %v224 = vpop.f32.mrf.mxu0
    %v225 = vadd.f32 0.0, %v224
    %v226 = vpop.f32.mrf.mxu0
    %227 = vdwg.mxu0
    %v228 = vadd.f32 %v149, %v225
    %v229 = vtanh.pop %v228
    %v230 = vpack.c.bf16 %v229, %v229
    %231 = vst [vmem:[%s4] sm:$0x1] %v230
    %v232 = vld [vmem:[#allocation3 + $0x2] sm:$0x3]
    %v233 = vld [vmem:[#allocation6] sm:$0xf]
    %v234 = vld [vmem:[#allocation6 + $0x4] sm:$0xf]
    %v235 = vld [vmem:[#allocation6 + $0x8] sm:$0xf]
    %v236 = vld [vmem:[#allocation6 + $0xc] sm:$0xf]
    %v237 = vld [vmem:[#allocation6 + $0x10] sm:$0xf]
    %v238 = vld [vmem:[#allocation6 + $0x14] sm:$0xf]
    %v239 = vld [vmem:[#allocation6 + $0x18] sm:$0xf]
    %v240 = vld [vmem:[#allocation6 + $0x1c] sm:$0xf]
    %v241 = vld [vmem:[#allocation6 + $0x20] sm:$0xf]
    %v242 = vld [vmem:[#allocation6 + $0x24] sm:$0xf]
    %v243 = vld [vmem:[#allocation6 + $0x28] sm:$0xf]
    %v244 = vld [vmem:[#allocation6 + $0x2c] sm:$0xf]
    %v245 = vld [vmem:[#allocation6 + $0x30] sm:$0xf]
    %v246 = vld [vmem:[#allocation6 + $0x34] sm:$0xf]
    %v247 = vld [vmem:[#allocation6 + $0x38] sm:$0xf]
    %v248 = vld [vmem:[#allocation6 + $0x3c] sm:$0xf]
    %v265 = vunpack.c.l.b16 %v233
    %v266 = vunpack.c.l.b16 %v234
    %v267 = vunpack.c.l.b16 %v235
    %v268 = vunpack.c.l.b16 %v236
    %v269 = vunpack.c.l.b16 %v237
    %v270 = vunpack.c.l.b16 %v238
    %v271 = vunpack.c.l.b16 %v239
    %v272 = vunpack.c.l.b16 %v240
    %v273 = vunpack.c.l.b16 %v241
    %v274 = vunpack.c.l.b16 %v242
    %v275 = vunpack.c.l.b16 %v243
    %v276 = vunpack.c.l.b16 %v244
    %v277 = vunpack.c.l.b16 %v245
    %v278 = vunpack.c.l.b16 %v246
    %v279 = vunpack.c.l.b16 %v247
    %v280 = vunpack.c.l.b16 %v248
    %v281 = vpack.c.b16 %v266, %v265
    %v282 = vpack.c.b16 %v268, %v267
    %v283 = vpack.c.b16 %v270, %v269
    %v284 = vpack.c.b16 %v272, %v271
    %v285 = vpack.c.b16 %v274, %v273
    %v286 = vpack.c.b16 %v276, %v275
    %v287 = vpack.c.b16 %v278, %v277
    %v288 = vpack.c.b16 %v280, %v279
    %297 = vmatpush.bf16.msra.mxu0 %v288
    %298 = vmatpush.bf16.msra.mxu0 %v287
    %299 = vmatpush.bf16.msra.mxu0 %v286
    %300 = vmatpush.bf16.msra.mxu0 %v285
    %301 = vmatpush.bf16.msra.mxu0 %v284
    %302 = vmatpush.bf16.msra.mxu0 %v283
    %303 = vmatpush.bf16.msra.mxu0 %v282
    %304 = vmatpush.bf16.msra.mxu0 %v281
    %305 = vmatmul.bf16.gmra.mxu0 %v230
    %v306 = vpop.f32.mrf.mxu0
    %v307 = vadd.f32 0.0, %v306
    %v308 = vpop.f32.mrf.mxu0
    %309 = vdwg.mxu0
    %v310 = vadd.f32 %v232, %v307
    %v311 = vtanh.pop %v310
    %v312 = vpack.c.bf16 %v311, %v311
    %v314 = vrot.slane %v312, 7
    %316 = vst [vmem:[%s4] sm:$0x2] %v314
    %v317 = vld [vmem:[#allocation3 + $0x4] sm:$0x3]
    %v318 = vld [vmem:[#allocation6] sm:$0xf]
    %v319 = vld [vmem:[#allocation6 + $0x4] sm:$0xf]
    %v320 = vld [vmem:[#allocation6 + $0x8] sm:$0xf]
    %v321 = vld [vmem:[#allocation6 + $0xc] sm:$0xf]
    %v322 = vld [vmem:[#allocation6 + $0x10] sm:$0xf]
    %v323 = vld [vmem:[#allocation6 + $0x14] sm:$0xf]
    %v324 = vld [vmem:[#allocation6 + $0x18] sm:$0xf]
    %v325 = vld [vmem:[#allocation6 + $0x1c] sm:$0xf]
    %v326 = vld [vmem:[#allocation6 + $0x20] sm:$0xf]
    %v327 = vld [vmem:[#allocation6 + $0x24] sm:$0xf]
    %v328 = vld [vmem:[#allocation6 + $0x28] sm:$0xf]
    %v329 = vld [vmem:[#allocation6 + $0x2c] sm:$0xf]
    %v330 = vld [vmem:[#allocation6 + $0x30] sm:$0xf]
    %v331 = vld [vmem:[#allocation6 + $0x34] sm:$0xf]
    %v332 = vld [vmem:[#allocation6 + $0x38] sm:$0xf]
    %v333 = vld [vmem:[#allocation6 + $0x3c] sm:$0xf]
    %v350 = vunpack.c.l.b16 %v318
    %v351 = vunpack.c.l.b16 %v319
    %v352 = vunpack.c.l.b16 %v320
    %v353 = vunpack.c.l.b16 %v321
    %v354 = vunpack.c.l.b16 %v322
    %v355 = vunpack.c.l.b16 %v323
    %v356 = vunpack.c.l.b16 %v324
    %v357 = vunpack.c.l.b16 %v325
    %v358 = vunpack.c.l.b16 %v326
    %v359 = vunpack.c.l.b16 %v327
    %v360 = vunpack.c.l.b16 %v328
    %v361 = vunpack.c.l.b16 %v329
    %v362 = vunpack.c.l.b16 %v330
    %v363 = vunpack.c.l.b16 %v331
    %v364 = vunpack.c.l.b16 %v332
    %v365 = vunpack.c.l.b16 %v333
    %v366 = vpack.c.b16 %v351, %v350
    %v367 = vpack.c.b16 %v353, %v352
    %v368 = vpack.c.b16 %v355, %v354
    %v369 = vpack.c.b16 %v357, %v356
    %v370 = vpack.c.b16 %v359, %v358
    %v371 = vpack.c.b16 %v361, %v360
    %v372 = vpack.c.b16 %v363, %v362
    %v373 = vpack.c.b16 %v365, %v364
    %382 = vmatpush.bf16.msra.mxu0 %v373
    %383 = vmatpush.bf16.msra.mxu0 %v372
    %384 = vmatpush.bf16.msra.mxu0 %v371
    %385 = vmatpush.bf16.msra.mxu0 %v370
    %386 = vmatpush.bf16.msra.mxu0 %v369
    %387 = vmatpush.bf16.msra.mxu0 %v368
    %388 = vmatpush.bf16.msra.mxu0 %v367
    %389 = vmatpush.bf16.msra.mxu0 %v366
    %390 = vmatmul.bf16.gmra.mxu0 %v312
    %v391 = vpop.f32.mrf.mxu0
    %v392 = vadd.f32 0.0, %v391
    %v393 = vpop.f32.mrf.mxu0
    %394 = vdwg.mxu0
    %v395 = vadd.f32 %v317, %v392
    %v396 = vtanh.pop %v395
    %v397 = vpack.c.bf16 %v396, %v396
    %v399 = vrot.slane %v397, 6
    %401 = vst [vmem:[%s4] sm:$0x4] %v399
    %v402 = vld [vmem:[#allocation3 + $0x6] sm:$0x3]
    %v403 = vld [vmem:[#allocation6] sm:$0xf]
    %v404 = vld [vmem:[#allocation6 + $0x4] sm:$0xf]
    %v405 = vld [vmem:[#allocation6 + $0x8] sm:$0xf]
    %v406 = vld [vmem:[#allocation6 + $0xc] sm:$0xf]
    %v407 = vld [vmem:[#allocation6 + $0x10] sm:$0xf]
    %v408 = vld [vmem:[#allocation6 + $0x14] sm:$0xf]
    %v409 = vld [vmem:[#allocation6 + $0x18] sm:$0xf]
    %v410 = vld [vmem:[#allocation6 + $0x1c] sm:$0xf]
    %v411 = vld [vmem:[#allocation6 + $0x20] sm:$0xf]
    %v412 = vld [vmem:[#allocation6 + $0x24] sm:$0xf]
    %v413 = vld [vmem:[#allocation6 + $0x28] sm:$0xf]
    %v414 = vld [vmem:[#allocation6 + $0x2c] sm:$0xf]
    %v415 = vld [vmem:[#allocation6 + $0x30] sm:$0xf]
    %v416 = vld [vmem:[#allocation6 + $0x34] sm:$0xf]
    %v417 = vld [vmem:[#allocation6 + $0x38] sm:$0xf]
    %v418 = vld [vmem:[#allocation6 + $0x3c] sm:$0xf]
    %v435 = vunpack.c.l.b16 %v403
    %v436 = vunpack.c.l.b16 %v404
    %v437 = vunpack.c.l.b16 %v405
    %v438 = vunpack.c.l.b16 %v406
    %v439 = vunpack.c.l.b16 %v407
    %v440 = vunpack.c.l.b16 %v408
    %v441 = vunpack.c.l.b16 %v409
    %v442 = vunpack.c.l.b16 %v410
    %v443 = vunpack.c.l.b16 %v411
    %v444 = vunpack.c.l.b16 %v412
    %v445 = vunpack.c.l.b16 %v413
    %v446 = vunpack.c.l.b16 %v414
    %v447 = vunpack.c.l.b16 %v415
    %v448 = vunpack.c.l.b16 %v416
    %v449 = vunpack.c.l.b16 %v417
    %v450 = vunpack.c.l.b16 %v418
    %v451 = vpack.c.b16 %v436, %v435
    %v452 = vpack.c.b16 %v438, %v437
    %v453 = vpack.c.b16 %v440, %v439
    %v454 = vpack.c.b16 %v442, %v441
    %v455 = vpack.c.b16 %v444, %v443
    %v456 = vpack.c.b16 %v446, %v445
    %v457 = vpack.c.b16 %v448, %v447
    %v458 = vpack.c.b16 %v450, %v449
    %467 = vmatpush.bf16.msra.mxu0 %v458
    %468 = vmatpush.bf16.msra.mxu0 %v457
    %469 = vmatpush.bf16.msra.mxu0 %v456
    %470 = vmatpush.bf16.msra.mxu0 %v455
    %471 = vmatpush.bf16.msra.mxu0 %v454
    %472 = vmatpush.bf16.msra.mxu0 %v453
    %473 = vmatpush.bf16.msra.mxu0 %v452
    %474 = vmatpush.bf16.msra.mxu0 %v451
    %475 = vmatmul.bf16.gmra.mxu0 %v397
    %v476 = vpop.f32.mrf.mxu0
    %v477 = vadd.f32 0.0, %v476
    %v478 = vpop.f32.mrf.mxu0
    %479 = vdwg.mxu0
    %v480 = vadd.f32 %v402, %v477
    %v481 = vtanh.pop %v480
    %v482 = vpack.c.bf16 %v481, %v481
    %v484 = vrot.slane %v482, 5
    %486 = vst [vmem:[%s4] sm:$0x8] %v484
    %v487 = vld [vmem:[#allocation3 + $0x8] sm:$0x3]
    %v488 = vld [vmem:[#allocation6] sm:$0xf]
    %v489 = vld [vmem:[#allocation6 + $0x4] sm:$0xf]
    %v490 = vld [vmem:[#allocation6 + $0x8] sm:$0xf]
    %v491 = vld [vmem:[#allocation6 + $0xc] sm:$0xf]
    %v492 = vld [vmem:[#allocation6 + $0x10] sm:$0xf]
    %v493 = vld [vmem:[#allocation6 + $0x14] sm:$0xf]
    %v494 = vld [vmem:[#allocation6 + $0x18] sm:$0xf]
    %v495 = vld [vmem:[#allocation6 + $0x1c] sm:$0xf]
    %v496 = vld [vmem:[#allocation6 + $0x20] sm:$0xf]
    %v497 = vld [vmem:[#allocation6 + $0x24] sm:$0xf]
    %v498 = vld [vmem:[#allocation6 + $0x28] sm:$0xf]
    %v499 = vld [vmem:[#allocation6 + $0x2c] sm:$0xf]
    %v500 = vld [vmem:[#allocation6 + $0x30] sm:$0xf]
    %v501 = vld [vmem:[#allocation6 + $0x34] sm:$0xf]
    %v502 = vld [vmem:[#allocation6 + $0x38] sm:$0xf]
    %v503 = vld [vmem:[#allocation6 + $0x3c] sm:$0xf]
    %v520 = vunpack.c.l.b16 %v488
    %v521 = vunpack.c.l.b16 %v489
    %v522 = vunpack.c.l.b16 %v490
    %v523 = vunpack.c.l.b16 %v491
    %v524 = vunpack.c.l.b16 %v492
    %v525 = vunpack.c.l.b16 %v493
    %v526 = vunpack.c.l.b16 %v494
    %v527 = vunpack.c.l.b16 %v495
    %v528 = vunpack.c.l.b16 %v496
    %v529 = vunpack.c.l.b16 %v497
    %v530 = vunpack.c.l.b16 %v498
    %v531 = vunpack.c.l.b16 %v499
    %v532 = vunpack.c.l.b16 %v500
    %v533 = vunpack.c.l.b16 %v501
    %v534 = vunpack.c.l.b16 %v502
    %v535 = vunpack.c.l.b16 %v503
    %v536 = vpack.c.b16 %v521, %v520
    %v537 = vpack.c.b16 %v523, %v522
    %v538 = vpack.c.b16 %v525, %v524
    %v539 = vpack.c.b16 %v527, %v526
    %v540 = vpack.c.b16 %v529, %v528
    %v541 = vpack.c.b16 %v531, %v530
    %v542 = vpack.c.b16 %v533, %v532
    %v543 = vpack.c.b16 %v535, %v534
    %552 = vmatpush.bf16.msra.mxu0 %v543
    %553 = vmatpush.bf16.msra.mxu0 %v542
    %554 = vmatpush.bf16.msra.mxu0 %v541
    %555 = vmatpush.bf16.msra.mxu0 %v540
    %556 = vmatpush.bf16.msra.mxu0 %v539
    %557 = vmatpush.bf16.msra.mxu0 %v538
    %558 = vmatpush.bf16.msra.mxu0 %v537
    %559 = vmatpush.bf16.msra.mxu0 %v536
    %560 = vmatmul.bf16.gmra.mxu0 %v482
    %v561 = vpop.f32.mrf.mxu0
    %v562 = vadd.f32 0.0, %v561
    %v563 = vpop.f32.mrf.mxu0
    %564 = vdwg.mxu0
    %v565 = vadd.f32 %v487, %v562
    %v566 = vtanh.pop %v565
    %v567 = vpack.c.bf16 %v566, %v566
    %568 = vst [vmem:[%s4 + $0x4] sm:$0x1] %v567
    %v569 = vld [vmem:[#allocation3 + $0xa] sm:$0x3]
    %v570 = vld [vmem:[#allocation6] sm:$0xf]
    %v571 = vld [vmem:[#allocation6 + $0x4] sm:$0xf]
    %v572 = vld [vmem:[#allocation6 + $0x8] sm:$0xf]
    %v573 = vld [vmem:[#allocation6 + $0xc] sm:$0xf]
    %v574 = vld [vmem:[#allocation6 + $0x10] sm:$0xf]
    %v575 = vld [vmem:[#allocation6 + $0x14] sm:$0xf]
    %v576 = vld [vmem:[#allocation6 + $0x18] sm:$0xf]
    %v577 = vld [vmem:[#allocation6 + $0x1c] sm:$0xf]
    %v578 = vld [vmem:[#allocation6 + $0x20] sm:$0xf]
    %v579 = vld [vmem:[#allocation6 + $0x24] sm:$0xf]
    %v580 = vld [vmem:[#allocation6 + $0x28] sm:$0xf]
    %v581 = vld [vmem:[#allocation6 + $0x2c] sm:$0xf]
    %v582 = vld [vmem:[#allocation6 + $0x30] sm:$0xf]
    %v583 = vld [vmem:[#allocation6 + $0x34] sm:$0xf]
    %v584 = vld [vmem:[#allocation6 + $0x38] sm:$0xf]
    %v585 = vld [vmem:[#allocation6 + $0x3c] sm:$0xf]
    %v602 = vunpack.c.l.b16 %v570
    %v603 = vunpack.c.l.b16 %v571
    %v604 = vunpack.c.l.b16 %v572
    %v605 = vunpack.c.l.b16 %v573
    %v606 = vunpack.c.l.b16 %v574
    %v607 = vunpack.c.l.b16 %v575
    %v608 = vunpack.c.l.b16 %v576
    %v609 = vunpack.c.l.b16 %v577
    %v610 = vunpack.c.l.b16 %v578
    %v611 = vunpack.c.l.b16 %v579
    %v612 = vunpack.c.l.b16 %v580
    %v613 = vunpack.c.l.b16 %v581
    %v614 = vunpack.c.l.b16 %v582
    %v615 = vunpack.c.l.b16 %v583
    %v616 = vunpack.c.l.b16 %v584
    %v617 = vunpack.c.l.b16 %v585
    %v618 = vpack.c.b16 %v603, %v602
    %v619 = vpack.c.b16 %v605, %v604
    %v620 = vpack.c.b16 %v607, %v606
    %v621 = vpack.c.b16 %v609, %v608
    %v622 = vpack.c.b16 %v611, %v610
    %v623 = vpack.c.b16 %v613, %v612
    %v624 = vpack.c.b16 %v615, %v614
    %v625 = vpack.c.b16 %v617, %v616
    %634 = vmatpush.bf16.msra.mxu0 %v625
    %635 = vmatpush.bf16.msra.mxu0 %v624
    %636 = vmatpush.bf16.msra.mxu0 %v623
    %637 = vmatpush.bf16.msra.mxu0 %v622
    %638 = vmatpush.bf16.msra.mxu0 %v621
    %639 = vmatpush.bf16.msra.mxu0 %v620
    %640 = vmatpush.bf16.msra.mxu0 %v619
    %641 = vmatpush.bf16.msra.mxu0 %v618
    %642 = vmatmul.bf16.gmra.mxu0 %v567
    %v643 = vpop.f32.mrf.mxu0
    %v644 = vadd.f32 0.0, %v643
    %v645 = vpop.f32.mrf.mxu0
    %646 = vdwg.mxu0
    %v647 = vadd.f32 %v569, %v644
    %v648 = vtanh.pop %v647
    %v649 = vpack.c.bf16 %v648, %v648
    %v651 = vrot.slane %v649, 7
    %653 = vst [vmem:[%s4 + $0x4] sm:$0x2] %v651
    %v654 = vld [vmem:[#allocation3 + $0xc] sm:$0x3]
    %v655 = vld [vmem:[#allocation6] sm:$0xf]
    %v656 = vld [vmem:[#allocation6 + $0x4] sm:$0xf]
    %v657 = vld [vmem:[#allocation6 + $0x8] sm:$0xf]
    %v658 = vld [vmem:[#allocation6 + $0xc] sm:$0xf]
    %v659 = vld [vmem:[#allocation6 + $0x10] sm:$0xf]
    %v660 = vld [vmem:[#allocation6 + $0x14] sm:$0xf]
    %v661 = vld [vmem:[#allocation6 + $0x18] sm:$0xf]
    %v662 = vld [vmem:[#allocation6 + $0x1c] sm:$0xf]
    %v663 = vld [vmem:[#allocation6 + $0x20] sm:$0xf]
    %v664 = vld [vmem:[#allocation6 + $0x24] sm:$0xf]
    %v665 = vld [vmem:[#allocation6 + $0x28] sm:$0xf]
    %v666 = vld [vmem:[#allocation6 + $0x2c] sm:$0xf]
    %v667 = vld [vmem:[#allocation6 + $0x30] sm:$0xf]
    %v668 = vld [vmem:[#allocation6 + $0x34] sm:$0xf]
    %v669 = vld [vmem:[#allocation6 + $0x38] sm:$0xf]
    %v670 = vld [vmem:[#allocation6 + $0x3c] sm:$0xf]
    %v687 = vunpack.c.l.b16 %v655
    %v688 = vunpack.c.l.b16 %v656
    %v689 = vunpack.c.l.b16 %v657
    %v690 = vunpack.c.l.b16 %v658
    %v691 = vunpack.c.l.b16 %v659
    %v692 = vunpack.c.l.b16 %v660
    %v693 = vunpack.c.l.b16 %v661
    %v694 = vunpack.c.l.b16 %v662
    %v695 = vunpack.c.l.b16 %v663
    %v696 = vunpack.c.l.b16 %v664
    %v697 = vunpack.c.l.b16 %v665
    %v698 = vunpack.c.l.b16 %v666
    %v699 = vunpack.c.l.b16 %v667
    %v700 = vunpack.c.l.b16 %v668
    %v701 = vunpack.c.l.b16 %v669
    %v702 = vunpack.c.l.b16 %v670
    %v703 = vpack.c.b16 %v688, %v687
    %v704 = vpack.c.b16 %v690, %v689
    %v705 = vpack.c.b16 %v692, %v691
    %v706 = vpack.c.b16 %v694, %v693
    %v707 = vpack.c.b16 %v696, %v695
    %v708 = vpack.c.b16 %v698, %v697
    %v709 = vpack.c.b16 %v700, %v699
    %v710 = vpack.c.b16 %v702, %v701
    %719 = vmatpush.bf16.msra.mxu0 %v710
    %720 = vmatpush.bf16.msra.mxu0 %v709
    %721 = vmatpush.bf16.msra.mxu0 %v708
    %722 = vmatpush.bf16.msra.mxu0 %v707
    %723 = vmatpush.bf16.msra.mxu0 %v706
    %724 = vmatpush.bf16.msra.mxu0 %v705
    %725 = vmatpush.bf16.msra.mxu0 %v704
    %726 = vmatpush.bf16.msra.mxu0 %v703
    %727 = vmatmul.bf16.gmra.mxu0 %v649
    %v728 = vpop.f32.mrf.mxu0
    %v729 = vadd.f32 0.0, %v728
    %v730 = vpop.f32.mrf.mxu0
    %731 = vdwg.mxu0
    %v732 = vadd.f32 %v654, %v729
    %v733 = vtanh.pop %v732
    %v734 = vpack.c.bf16 %v733, %v733
    %v736 = vrot.slane %v734, 6
    %738 = vst [vmem:[%s4 + $0x4] sm:$0x4] %v736
    %v739 = vld [vmem:[#allocation3 + $0xe] sm:$0x3]
    %v740 = vld [vmem:[#allocation6] sm:$0xf]
    %v741 = vld [vmem:[#allocation6 + $0x4] sm:$0xf]
    %v742 = vld [vmem:[#allocation6 + $0x8] sm:$0xf]
    %v743 = vld [vmem:[#allocation6 + $0xc] sm:$0xf]
    %v744 = vld [vmem:[#allocation6 + $0x10] sm:$0xf]
    %v745 = vld [vmem:[#allocation6 + $0x14] sm:$0xf]
    %v746 = vld [vmem:[#allocation6 + $0x18] sm:$0xf]
    %v747 = vld [vmem:[#allocation6 + $0x1c] sm:$0xf]
    %v748 = vld [vmem:[#allocation6 + $0x20] sm:$0xf]
    %v749 = vld [vmem:[#allocation6 + $0x24] sm:$0xf]
    %v750 = vld [vmem:[#allocation6 + $0x28] sm:$0xf]
    %v751 = vld [vmem:[#allocation6 + $0x2c] sm:$0xf]
    %v752 = vld [vmem:[#allocation6 + $0x30] sm:$0xf]
    %v753 = vld [vmem:[#allocation6 + $0x34] sm:$0xf]
    %v754 = vld [vmem:[#allocation6 + $0x38] sm:$0xf]
    %v755 = vld [vmem:[#allocation6 + $0x3c] sm:$0xf]
    %v772 = vunpack.c.l.b16 %v740
    %v773 = vunpack.c.l.b16 %v741
    %v774 = vunpack.c.l.b16 %v742
    %v775 = vunpack.c.l.b16 %v743
    %v776 = vunpack.c.l.b16 %v744
    %v777 = vunpack.c.l.b16 %v745
    %v778 = vunpack.c.l.b16 %v746
    %v779 = vunpack.c.l.b16 %v747
    %v780 = vunpack.c.l.b16 %v748
    %v781 = vunpack.c.l.b16 %v749
    %v782 = vunpack.c.l.b16 %v750
    %v783 = vunpack.c.l.b16 %v751
    %v784 = vunpack.c.l.b16 %v752
    %v785 = vunpack.c.l.b16 %v753
    %v786 = vunpack.c.l.b16 %v754
    %v787 = vunpack.c.l.b16 %v755
    %v788 = vpack.c.b16 %v773, %v772
    %v789 = vpack.c.b16 %v775, %v774
    %v790 = vpack.c.b16 %v777, %v776
    %v791 = vpack.c.b16 %v779, %v778
    %v792 = vpack.c.b16 %v781, %v780
    %v793 = vpack.c.b16 %v783, %v782
    %v794 = vpack.c.b16 %v785, %v784
    %v795 = vpack.c.b16 %v787, %v786
    %804 = vmatpush.bf16.msra.mxu0 %v795
    %805 = vmatpush.bf16.msra.mxu0 %v794
    %806 = vmatpush.bf16.msra.mxu0 %v793
    %807 = vmatpush.bf16.msra.mxu0 %v792
    %808 = vmatpush.bf16.msra.mxu0 %v791
    %809 = vmatpush.bf16.msra.mxu0 %v790
    %810 = vmatpush.bf16.msra.mxu0 %v789
    %811 = vmatpush.bf16.msra.mxu0 %v788
    %812 = vmatmul.bf16.gmra.mxu0 %v734
    %v813 = vpop.f32.mrf.mxu0
    %v814 = vadd.f32 0.0, %v813
    %v815 = vpop.f32.mrf.mxu0
    %816 = vdwg.mxu0
    %v817 = vadd.f32 %v739, %v814
    %v818 = vtanh.pop %v817
    %v819 = vpack.c.bf16 %v818, %v818
    %v821 = vrot.slane %v819, 5
    %823 = vst [vmem:[%s4 + $0x4] sm:$0x8] %v821
    %824 = vst [vmem:[#allocation2] sm:$0x3] %v818
    // Predicated region
    $region30: #{forward.4} parent=1 // pred_check
      %p825 = pneg %p143
    $region31: #{forward.4} parent=1 // pred_check_branch
      %827 = sbr.rel (%p825) target = $region33
    $region32: #{forward.4} parent=1 // pred_region
      %828 = vst [vmem:[%s5] sm:$0x3] %v818
    $region33: #{forward.4} parent=1 // pred_fallthru
      _
    // Predicated region
    $region34: #{forward.4} parent=1 // pred_check
      _
    $region35: #{forward.4} parent=1 // pred_check_branch
      %830 = sbr.rel (0) target = $region37
    $region36: #{forward.4} parent=1 // pred_region
      _
    $region37: #{forward.4} parent=1 // pred_fallthru
      _
    // Predicated region
    $region38: #{forward.4} parent=1 // pred_check
      _
    $region39: #{forward.4} parent=1 // pred_check_branch
      %832 = sbr.rel (0) target = $region41
    $region40: #{forward.4} parent=1 // pred_region
      _
    $region41: #{forward.4} parent=1 // pred_fallthru
      _
    // Predicated region
    $region42: #{forward.4} parent=1 // pred_check
      _
    $region43: #{forward.4} parent=1 // pred_check_branch
      %834 = sbr.rel (0) target = $region45
    $region44: #{forward.4} parent=1 // pred_region
      _
    $region45: #{forward.4} parent=1 // pred_fallthru
      _
    // Predicated region
    $region46: #{forward.4} parent=1 // pred_check
      _
    $region47: #{forward.4} parent=1 // pred_check_branch
      %836 = sbr.rel (0) target = $region49
    $region48: #{forward.4} parent=1 // pred_region
      _
    $region49: #{forward.4} parent=1 // pred_fallthru
      _
    %837 = vsyncpa [#allocation5], 1
    %838 = vsyncpa [#allocation7], 1

</llo_original>
